<compile_context>
chip_gen: v6e
topology: v6e:2x2x1
jax: 0.10.0
libtpu: 0.0.40
codegen_flags: <defaults>
</compile_context>

<pallas_src>
import math

import jax
import jax.numpy as jnp
import numpy as np
from jax.experimental import pallas as pl
from jax.experimental.pallas import tpu as pltpu  # noqa: F401  (TPU backend)


# ----------------------------------------------------------------------------
# Fused kernel: all layers + time loop + output head in one invocation.
# ----------------------------------------------------------------------------
def _make_fused_kernel(T, B, H, L):
    def kernel(*refs):
        # inputs : x2d, (wih_l, whh_l, b_l) * L, w_out, b_out
        # outputs: outs, h_STATE, c_STATE
        x_ref = refs[0]
        w_out_ref = refs[1 + 3 * L]
        b_out_ref = refs[2 + 3 * L]
        outs_ref = refs[3 + 3 * L]
        hS_ref = refs[4 + 3 * L]
        cS_ref = refs[5 + 3 * L]

        cur = x_ref[...]                                   # (T*B, in_dim), time-major rows
        h = jnp.zeros((B, H), jnp.float32)
        c = jnp.zeros((B, H), jnp.float32)

        for layer in range(L):
            wih = refs[1 + 3 * layer][...]                 # (in_dim, 4H)  pre-transposed
            whh = refs[2 + 3 * layer][...]                 # (H, 4H)       pre-transposed
            bias = refs[3 + 3 * layer][...]                # (1, 4H)       b_ih + b_hh

            # Hoisted input projection: one MXU matmul covering all T steps.
            xproj = jnp.dot(cur, wih,
                            preferred_element_type=jnp.float32) + bias  # (T*B, 4H)

            h = jnp.zeros((B, H), jnp.float32)
            c = jnp.zeros((B, H), jnp.float32)
            hs = []
            for t in range(T):                             # static unroll (small T)
                gates = xproj[t * B:(t + 1) * B, :] + jnp.dot(
                    h, whh, preferred_element_type=jnp.float32)          # (B, 4H)
                # Apply nonlinearities on the full gate vreg (unmasked EUP),
                # slice afterwards (PyTorch gate order: i, f, g, o).
                sig = jax.nn.sigmoid(gates)
                tnh = jnp.tanh(gates)
                i_g = sig[:, 0 * H:1 * H]
                f_g = sig[:, 1 * H:2 * H]
                g_g = tnh[:, 2 * H:3 * H]
                o_g = sig[:, 3 * H:4 * H]
                c = f_g * c + i_g * g_g
                h = o_g * jnp.tanh(c)
                hs.append(h)

            cur = jnp.concatenate(hs, axis=0)              # (T*B, H) -> next layer input
            hS_ref[layer] = h
            cS_ref[layer] = c

        # Output head: ReLU(h_STATE[-1]) @ W_out + b_out
        h_relu = jnp.maximum(h, 0.0)
        outs_ref[...] = (jnp.dot(h_relu, w_out_ref[...],
                                 preferred_element_type=jnp.float32)
                         + b_out_ref[...])

    return kernel


# ----------------------------------------------------------------------------
# Wrapper: layout work (transpose/reshape) done once in XLA, then one call.
# ----------------------------------------------------------------------------
def rnn_forward(params, x):
    """x: (B, T, input_size), batch_first like the PyTorch module.
    Returns (outs (B, 3), h_STATE (L, B, H), c_STATE (L, B, H))."""
    B, T, D = x.shape
    L = len(params["layers"])
    H = params["layers"][0][1].shape[0]          # W_hh^T is (H, 4H)
    O = params["w_out_t"].shape[1]

    # time-major rows: row index = t * B + b
    x2d = jnp.transpose(x, (1, 0, 2)).reshape(T * B, D)

    inputs = [x2d]
    in_specs = [pl.BlockSpec((T * B, D), lambda: (0, 0))]
    for (wih_t, whh_t, b2d) in params["layers"]:
        inputs += [wih_t, whh_t, b2d]
        in_specs += [
            pl.BlockSpec(wih_t.shape, lambda: (0, 0)),
            pl.BlockSpec(whh_t.shape, lambda: (0, 0)),
            pl.BlockSpec(b2d.shape, lambda: (0, 0)),
        ]
    inputs += [params["w_out_t"], params["b_out_2d"]]
    in_specs += [
        pl.BlockSpec(params["w_out_t"].shape, lambda: (0, 0)),
        pl.BlockSpec(params["b_out_2d"].shape, lambda: (0, 0)),
    ]

    out_shape = (
        jax.ShapeDtypeStruct((B, O), jnp.float32),
        jax.ShapeDtypeStruct((L, B, H), jnp.float32),
        jax.ShapeDtypeStruct((L, B, H), jnp.float32),
    )
    out_specs = (
        pl.BlockSpec((B, O), lambda: (0, 0)),
        pl.BlockSpec((L, B, H), lambda: (0, 0, 0)),
        pl.BlockSpec((L, B, H), lambda: (0, 0, 0)),
    )

    outs, h_STATE, c_STATE = pl.pallas_call(
        _make_fused_kernel(T, B, H, L),
        out_shape=out_shape,
        in_specs=in_specs,
        out_specs=out_specs,
    )(*inputs)
    return outs, h_STATE, c_STATE


# ----------------------------------------------------------------------------
# Parameter init (PyTorch-like uniform), weights stored pre-transposed.
# ----------------------------------------------------------------------------
def init_params(key, input_size, h_size, n_layers, out_features=3):
    params = {"layers": []}
    k = 1.0 / math.sqrt(h_size)
    for layer in range(n_layers):
        in_dim = input_size if layer == 0 else h_size
        key, k1, k2, k3, k4 = jax.random.split(key, 5)
        w_ih = jax.random.uniform(k1, (4 * h_size, in_dim), jnp.float32, -k, k)
        w_hh = jax.random.uniform(k2, (4 * h_size, h_size), jnp.float32, -k, k)
        b_ih = jax.random.uniform(k3, (4 * h_size,), jnp.float32, -k, k)
        b_hh = jax.random.uniform(k4, (4 * h_size,), jnp.float32, -k, k)
        # pre-transpose once; fold the two biases (done once, outside kernel)
        params["layers"].append(
            (w_ih.T, w_hh.T, (b_ih + b_hh).reshape(1, 4 * h_size)))
    key, k5, k6 = jax.random.split(key, 3)
    w_out = jax.random.uniform(k5, (out_features, h_size), jnp.float32, -k, k)
    b_out = jax.random.uniform(k6, (out_features,), jnp.float32, -k, k)
    params["w_out_t"] = w_out.T                      # (H, O)
    params["b_out_2d"] = b_out.reshape(1, out_features)
    return params


# ----------------------------------------------------------------------------
# Pure-JAX reference (for correctness check only)
# ----------------------------------------------------------------------------
def rnn_reference(params, x):
    B, T, D = x.shape
    H = params["layers"][0][1].shape[0]
    hi = jax.lax.Precision.HIGHEST
    cur = jnp.transpose(x, (1, 0, 2))                # (T, B, D)
    hs_list, cs_list = [], []
    for (wih_t, whh_t, b2d) in params["layers"]:
        def step(carry, x_t):
            h, c = carry
            gates = (jnp.dot(x_t, wih_t, precision=hi)
                     + jnp.dot(h, whh_t, precision=hi) + b2d[0])
            i = jax.nn.sigmoid(gates[:, 0 * H:1 * H])
            f = jax.nn.sigmoid(gates[:, 1 * H:2 * H])
            g = jnp.tanh(gates[:, 2 * H:3 * H])
            o = jax.nn.sigmoid(gates[:, 3 * H:4 * H])
            c = f * c + i * g
            h = o * jnp.tanh(c)
            return (h, c), h
        init = (jnp.zeros((B, H), jnp.float32), jnp.zeros((B, H), jnp.float32))
        (h_T, c_T), hseq = jax.lax.scan(step, init, cur)
        cur = hseq
        hs_list.append(h_T)
        cs_list.append(c_T)
    hS = jnp.stack(hs_list)
    cS = jnp.stack(cs_list)
    outs = (jnp.dot(jnp.maximum(hS[-1], 0.0), params["w_out_t"], precision=hi)
            + params["b_out_2d"][0])
    return outs, hS, cS


if __name__ == "__main__":
    INPUT_SIZE, H_SIZE, N_LAYERS = 16, 32, 2
    B, T = 2, 8

    key = jax.random.PRNGKey(0)
    key, kx = jax.random.split(key)
    x = jax.random.normal(kx, (B, T, INPUT_SIZE), dtype=jnp.float32)
    params = init_params(key, INPUT_SIZE, H_SIZE, N_LAYERS)

    outs, h_state, c_state = jax.jit(rnn_forward)(params, x)
    jax.block_until_ready((outs, h_state, c_state))

    assert outs.shape == (B, 3)
    assert h_state.shape == (N_LAYERS, B, H_SIZE)
    assert c_state.shape == (N_LAYERS, B, H_SIZE)

    # correctness vs. pure-JAX reference
    r_outs, r_h, r_c = rnn_reference(params, x)
    np.testing.assert_allclose(np.asarray(outs), np.asarray(r_outs),
                               atol=1e-3, rtol=1e-3)
    np.testing.assert_allclose(np.asarray(h_state), np.asarray(r_h),
                               atol=1e-3, rtol=1e-3)
    np.testing.assert_allclose(np.asarray(c_state), np.asarray(r_c),
                               atol=1e-3, rtol=1e-3)

    print("KERNEL_OK")
</pallas_src>

<mosaic_0001>
module attributes {stable_mosaic.version = 11 : i64} {
  func.func @kernel(%arg0: memref<16x16xf32, #tpu.memory_space<vmem>>, %arg1: memref<16x128xf32, #tpu.memory_space<vmem>>, %arg2: memref<32x128xf32, #tpu.memory_space<vmem>>, %arg3: memref<1x128xf32, #tpu.memory_space<vmem>>, %arg4: memref<32x128xf32, #tpu.memory_space<vmem>>, %arg5: memref<32x128xf32, #tpu.memory_space<vmem>>, %arg6: memref<1x128xf32, #tpu.memory_space<vmem>>, %arg7: memref<32x3xf32, #tpu.memory_space<vmem>>, %arg8: memref<1x3xf32, #tpu.memory_space<vmem>>, %arg9: memref<2x3xf32, #tpu.memory_space<vmem>>, %arg10: memref<2x2x32xf32, #tpu.memory_space<vmem>>, %arg11: memref<2x2x32xf32, #tpu.memory_space<vmem>>) attributes {dimension_semantics = [], scalar_prefetch = 0 : i64, scratch_operands = 0 : i64, tpu.core_type = #tpu.core_type<tc>} {
    %c0 = arith.constant 0 : index
    %c0_0 = arith.constant 0 : index
    %0 = vector.load %arg0[%c0, %c0_0] : memref<16x16xf32, #tpu.memory_space<vmem>>, vector<16x16xf32>
    %c0_1 = arith.constant 0 : index
    %c0_2 = arith.constant 0 : index
    %1 = vector.load %arg1[%c0_1, %c0_2] : memref<16x128xf32, #tpu.memory_space<vmem>>, vector<16x128xf32>
    %c0_3 = arith.constant 0 : index
    %c0_4 = arith.constant 0 : index
    %2 = vector.load %arg2[%c0_3, %c0_4] : memref<32x128xf32, #tpu.memory_space<vmem>>, vector<32x128xf32>
    %c0_5 = arith.constant 0 : index
    %c0_6 = arith.constant 0 : index
    %3 = vector.load %arg3[%c0_5, %c0_6] : memref<1x128xf32, #tpu.memory_space<vmem>>, vector<1x128xf32>
    %cst = arith.constant dense<0.000000e+00> : vector<16x128xf32>
    %4 = tpu.matmul %0, %1, %cst {dimension_numbers = #tpu.dot_dimension_numbers<[1], [0], [0], [1], [0, 0, 1, 1], [], []>} : vector<16x16xf32>, vector<16x128xf32>, vector<16x128xf32> -> vector<16x128xf32>
    %5 = vector.broadcast %3 : vector<1x128xf32> to vector<16x128xf32>
    %6 = arith.addf %4, %5 : vector<16x128xf32>
    %cst_7 = arith.constant 0.000000e+00 : f32
    %7 = vector.broadcast %cst_7 : f32 to vector<2x32xf32>
    %cst_8 = arith.constant 0.000000e+00 : f32
    %8 = vector.broadcast %cst_8 : f32 to vector<2x32xf32>
    %9 = vector.extract_strided_slice %6 {offsets = [0, 0], sizes = [2, 128], strides = [1, 1]} : vector<16x128xf32> to vector<2x128xf32>
    %cst_9 = arith.constant dense<0.000000e+00> : vector<2x128xf32>
    %10 = tpu.matmul %7, %2, %cst_9 {dimension_numbers = #tpu.dot_dimension_numbers<[1], [0], [0], [1], [0, 0, 1, 1], [], []>} : vector<2x32xf32>, vector<32x128xf32>, vector<2x128xf32> -> vector<2x128xf32>
    %11 = arith.addf %9, %10 : vector<2x128xf32>
    %12 = arith.negf %11 : vector<2x128xf32>
    %13 = math.exp %12 : vector<2x128xf32>
    %cst_10 = arith.constant 1.000000e+00 : f32
    %14 = vector.broadcast %cst_10 : f32 to vector<2x128xf32>
    %15 = arith.addf %14, %13 : vector<2x128xf32>
    %16 = arith.divf %14, %15 : vector<2x128xf32>
    %17 = math.tanh %11 : vector<2x128xf32>
    %18 = vector.extract_strided_slice %16 {offsets = [0, 0], sizes = [2, 32], strides = [1, 1]} : vector<2x128xf32> to vector<2x32xf32>
    %19 = vector.extract_strided_slice %16 {offsets = [0, 32], sizes = [2, 32], strides = [1, 1]} : vector<2x128xf32> to vector<2x32xf32>
    %20 = vector.extract_strided_slice %17 {offsets = [0, 64], sizes = [2, 32], strides = [1, 1]} : vector<2x128xf32> to vector<2x32xf32>
    %21 = vector.extract_strided_slice %16 {offsets = [0, 96], sizes = [2, 32], strides = [1, 1]} : vector<2x128xf32> to vector<2x32xf32>
    %22 = arith.mulf %19, %8 : vector<2x32xf32>
    %23 = arith.mulf %18, %20 : vector<2x32xf32>
    %24 = arith.addf %22, %23 : vector<2x32xf32>
    %25 = math.tanh %24 : vector<2x32xf32>
    %26 = arith.mulf %21, %25 : vector<2x32xf32>
    %27 = vector.extract_strided_slice %6 {offsets = [2, 0], sizes = [2, 128], strides = [1, 1]} : vector<16x128xf32> to vector<2x128xf32>
    %cst_11 = arith.constant dense<0.000000e+00> : vector<2x128xf32>
    %28 = tpu.matmul %26, %2, %cst_11 {dimension_numbers = #tpu.dot_dimension_numbers<[1], [0], [0], [1], [0, 0, 1, 1], [], []>} : vector<2x32xf32>, vector<32x128xf32>, vector<2x128xf32> -> vector<2x128xf32>
    %29 = arith.addf %27, %28 : vector<2x128xf32>
    %30 = arith.negf %29 : vector<2x128xf32>
    %31 = math.exp %30 : vector<2x128xf32>
    %cst_12 = arith.constant 1.000000e+00 : f32
    %32 = vector.broadcast %cst_12 : f32 to vector<2x128xf32>
    %33 = arith.addf %32, %31 : vector<2x128xf32>
    %34 = arith.divf %32, %33 : vector<2x128xf32>
    %35 = math.tanh %29 : vector<2x128xf32>
    %36 = vector.extract_strided_slice %34 {offsets = [0, 0], sizes = [2, 32], strides = [1, 1]} : vector<2x128xf32> to vector<2x32xf32>
    %37 = vector.extract_strided_slice %34 {offsets = [0, 32], sizes = [2, 32], strides = [1, 1]} : vector<2x128xf32> to vector<2x32xf32>
    %38 = vector.extract_strided_slice %35 {offsets = [0, 64], sizes = [2, 32], strides = [1, 1]} : vector<2x128xf32> to vector<2x32xf32>
    %39 = vector.extract_strided_slice %34 {offsets = [0, 96], sizes = [2, 32], strides = [1, 1]} : vector<2x128xf32> to vector<2x32xf32>
    %40 = arith.mulf %37, %24 : vector<2x32xf32>
    %41 = arith.mulf %36, %38 : vector<2x32xf32>
    %42 = arith.addf %40, %41 : vector<2x32xf32>
    %43 = math.tanh %42 : vector<2x32xf32>
    %44 = arith.mulf %39, %43 : vector<2x32xf32>
    %45 = vector.extract_strided_slice %6 {offsets = [4, 0], sizes = [2, 128], strides = [1, 1]} : vector<16x128xf32> to vector<2x128xf32>
    %cst_13 = arith.constant dense<0.000000e+00> : vector<2x128xf32>
    %46 = tpu.matmul %44, %2, %cst_13 {dimension_numbers = #tpu.dot_dimension_numbers<[1], [0], [0], [1], [0, 0, 1, 1], [], []>} : vector<2x32xf32>, vector<32x128xf32>, vector<2x128xf32> -> vector<2x128xf32>
    %47 = arith.addf %45, %46 : vector<2x128xf32>
    %48 = arith.negf %47 : vector<2x128xf32>
    %49 = math.exp %48 : vector<2x128xf32>
    %cst_14 = arith.constant 1.000000e+00 : f32
    %50 = vector.broadcast %cst_14 : f32 to vector<2x128xf32>
    %51 = arith.addf %50, %49 : vector<2x128xf32>
    %52 = arith.divf %50, %51 : vector<2x128xf32>
    %53 = math.tanh %47 : vector<2x128xf32>
    %54 = vector.extract_strided_slice %52 {offsets = [0, 0], sizes = [2, 32], strides = [1, 1]} : vector<2x128xf32> to vector<2x32xf32>
    %55 = vector.extract_strided_slice %52 {offsets = [0, 32], sizes = [2, 32], strides = [1, 1]} : vector<2x128xf32> to vector<2x32xf32>
    %56 = vector.extract_strided_slice %53 {offsets = [0, 64], sizes = [2, 32], strides = [1, 1]} : vector<2x128xf32> to vector<2x32xf32>
    %57 = vector.extract_strided_slice %52 {offsets = [0, 96], sizes = [2, 32], strides = [1, 1]} : vector<2x128xf32> to vector<2x32xf32>
    %58 = arith.mulf %55, %42 : vector<2x32xf32>
    %59 = arith.mulf %54, %56 : vector<2x32xf32>
    %60 = arith.addf %58, %59 : vector<2x32xf32>
    %61 = math.tanh %60 : vector<2x32xf32>
    %62 = arith.mulf %57, %61 : vector<2x32xf32>
    %63 = vector.extract_strided_slice %6 {offsets = [6, 0], sizes = [2, 128], strides = [1, 1]} : vector<16x128xf32> to vector<2x128xf32>
    %cst_15 = arith.constant dense<0.000000e+00> : vector<2x128xf32>
    %64 = tpu.matmul %62, %2, %cst_15 {dimension_numbers = #tpu.dot_dimension_numbers<[1], [0], [0], [1], [0, 0, 1, 1], [], []>} : vector<2x32xf32>, vector<32x128xf32>, vector<2x128xf32> -> vector<2x128xf32>
    %65 = arith.addf %63, %64 : vector<2x128xf32>
    %66 = arith.negf %65 : vector<2x128xf32>
    %67 = math.exp %66 : vector<2x128xf32>
    %cst_16 = arith.constant 1.000000e+00 : f32
    %68 = vector.broadcast %cst_16 : f32 to vector<2x128xf32>
    %69 = arith.addf %68, %67 : vector<2x128xf32>
    %70 = arith.divf %68, %69 : vector<2x128xf32>
    %71 = math.tanh %65 : vector<2x128xf32>
    %72 = vector.extract_strided_slice %70 {offsets = [0, 0], sizes = [2, 32], strides = [1, 1]} : vector<2x128xf32> to vector<2x32xf32>
    %73 = vector.extract_strided_slice %70 {offsets = [0, 32], sizes = [2, 32], strides = [1, 1]} : vector<2x128xf32> to vector<2x32xf32>
    %74 = vector.extract_strided_slice %71 {offsets = [0, 64], sizes = [2, 32], strides = [1, 1]} : vector<2x128xf32> to vector<2x32xf32>
    %75 = vector.extract_strided_slice %70 {offsets = [0, 96], sizes = [2, 32], strides = [1, 1]} : vector<2x128xf32> to vector<2x32xf32>
    %76 = arith.mulf %73, %60 : vector<2x32xf32>
    %77 = arith.mulf %72, %74 : vector<2x32xf32>
    %78 = arith.addf %76, %77 : vector<2x32xf32>
    %79 = math.tanh %78 : vector<2x32xf32>
    %80 = arith.mulf %75, %79 : vector<2x32xf32>
    %81 = vector.extract_strided_slice %6 {offsets = [8, 0], sizes = [2, 128], strides = [1, 1]} : vector<16x128xf32> to vector<2x128xf32>
    %cst_17 = arith.constant dense<0.000000e+00> : vector<2x128xf32>
    %82 = tpu.matmul %80, %2, %cst_17 {dimension_numbers = #tpu.dot_dimension_numbers<[1], [0], [0], [1], [0, 0, 1, 1], [], []>} : vector<2x32xf32>, vector<32x128xf32>, vector<2x128xf32> -> vector<2x128xf32>
    %83 = arith.addf %81, %82 : vector<2x128xf32>
    %84 = arith.negf %83 : vector<2x128xf32>
    %85 = math.exp %84 : vector<2x128xf32>
    %cst_18 = arith.constant 1.000000e+00 : f32
    %86 = vector.broadcast %cst_18 : f32 to vector<2x128xf32>
    %87 = arith.addf %86, %85 : vector<2x128xf32>
    %88 = arith.divf %86, %87 : vector<2x128xf32>
    %89 = math.tanh %83 : vector<2x128xf32>
    %90 = vector.extract_strided_slice %88 {offsets = [0, 0], sizes = [2, 32], strides = [1, 1]} : vector<2x128xf32> to vector<2x32xf32>
    %91 = vector.extract_strided_slice %88 {offsets = [0, 32], sizes = [2, 32], strides = [1, 1]} : vector<2x128xf32> to vector<2x32xf32>
    %92 = vector.extract_strided_slice %89 {offsets = [0, 64], sizes = [2, 32], strides = [1, 1]} : vector<2x128xf32> to vector<2x32xf32>
    %93 = vector.extract_strided_slice %88 {offsets = [0, 96], sizes = [2, 32], strides = [1, 1]} : vector<2x128xf32> to vector<2x32xf32>
    %94 = arith.mulf %91, %78 : vector<2x32xf32>
    %95 = arith.mulf %90, %92 : vector<2x32xf32>
    %96 = arith.addf %94, %95 : vector<2x32xf32>
    %97 = math.tanh %96 : vector<2x32xf32>
    %98 = arith.mulf %93, %97 : vector<2x32xf32>
    %99 = vector.extract_strided_slice %6 {offsets = [10, 0], sizes = [2, 128], strides = [1, 1]} : vector<16x128xf32> to vector<2x128xf32>
    %cst_19 = arith.constant dense<0.000000e+00> : vector<2x128xf32>
    %100 = tpu.matmul %98, %2, %cst_19 {dimension_numbers = #tpu.dot_dimension_numbers<[1], [0], [0], [1], [0, 0, 1, 1], [], []>} : vector<2x32xf32>, vector<32x128xf32>, vector<2x128xf32> -> vector<2x128xf32>
    %101 = arith.addf %99, %100 : vector<2x128xf32>
    %102 = arith.negf %101 : vector<2x128xf32>
    %103 = math.exp %102 : vector<2x128xf32>
    %cst_20 = arith.constant 1.000000e+00 : f32
    %104 = vector.broadcast %cst_20 : f32 to vector<2x128xf32>
    %105 = arith.addf %104, %103 : vector<2x128xf32>
    %106 = arith.divf %104, %105 : vector<2x128xf32>
    %107 = math.tanh %101 : vector<2x128xf32>
    %108 = vector.extract_strided_slice %106 {offsets = [0, 0], sizes = [2, 32], strides = [1, 1]} : vector<2x128xf32> to vector<2x32xf32>
    %109 = vector.extract_strided_slice %106 {offsets = [0, 32], sizes = [2, 32], strides = [1, 1]} : vector<2x128xf32> to vector<2x32xf32>
    %110 = vector.extract_strided_slice %107 {offsets = [0, 64], sizes = [2, 32], strides = [1, 1]} : vector<2x128xf32> to vector<2x32xf32>
    %111 = vector.extract_strided_slice %106 {offsets = [0, 96], sizes = [2, 32], strides = [1, 1]} : vector<2x128xf32> to vector<2x32xf32>
    %112 = arith.mulf %109, %96 : vector<2x32xf32>
    %113 = arith.mulf %108, %110 : vector<2x32xf32>
    %114 = arith.addf %112, %113 : vector<2x32xf32>
    %115 = math.tanh %114 : vector<2x32xf32>
    %116 = arith.mulf %111, %115 : vector<2x32xf32>
    %117 = vector.extract_strided_slice %6 {offsets = [12, 0], sizes = [2, 128], strides = [1, 1]} : vector<16x128xf32> to vector<2x128xf32>
    %cst_21 = arith.constant dense<0.000000e+00> : vector<2x128xf32>
    %118 = tpu.matmul %116, %2, %cst_21 {dimension_numbers = #tpu.dot_dimension_numbers<[1], [0], [0], [1], [0, 0, 1, 1], [], []>} : vector<2x32xf32>, vector<32x128xf32>, vector<2x128xf32> -> vector<2x128xf32>
    %119 = arith.addf %117, %118 : vector<2x128xf32>
    %120 = arith.negf %119 : vector<2x128xf32>
    %121 = math.exp %120 : vector<2x128xf32>
    %cst_22 = arith.constant 1.000000e+00 : f32
    %122 = vector.broadcast %cst_22 : f32 to vector<2x128xf32>
    %123 = arith.addf %122, %121 : vector<2x128xf32>
    %124 = arith.divf %122, %123 : vector<2x128xf32>
    %125 = math.tanh %119 : vector<2x128xf32>
    %126 = vector.extract_strided_slice %124 {offsets = [0, 0], sizes = [2, 32], strides = [1, 1]} : vector<2x128xf32> to vector<2x32xf32>
    %127 = vector.extract_strided_slice %124 {offsets = [0, 32], sizes = [2, 32], strides = [1, 1]} : vector<2x128xf32> to vector<2x32xf32>
    %128 = vector.extract_strided_slice %125 {offsets = [0, 64], sizes = [2, 32], strides = [1, 1]} : vector<2x128xf32> to vector<2x32xf32>
    %129 = vector.extract_strided_slice %124 {offsets = [0, 96], sizes = [2, 32], strides = [1, 1]} : vector<2x128xf32> to vector<2x32xf32>
    %130 = arith.mulf %127, %114 : vector<2x32xf32>
    %131 = arith.mulf %126, %128 : vector<2x32xf32>
    %132 = arith.addf %130, %131 : vector<2x32xf32>
    %133 = math.tanh %132 : vector<2x32xf32>
    %134 = arith.mulf %129, %133 : vector<2x32xf32>
    %135 = vector.extract_strided_slice %6 {offsets = [14, 0], sizes = [2, 128], strides = [1, 1]} : vector<16x128xf32> to vector<2x128xf32>
    %cst_23 = arith.constant dense<0.000000e+00> : vector<2x128xf32>
    %136 = tpu.matmul %134, %2, %cst_23 {dimension_numbers = #tpu.dot_dimension_numbers<[1], [0], [0], [1], [0, 0, 1, 1], [], []>} : vector<2x32xf32>, vector<32x128xf32>, vector<2x128xf32> -> vector<2x128xf32>
    %137 = arith.addf %135, %136 : vector<2x128xf32>
    %138 = arith.negf %137 : vector<2x128xf32>
    %139 = math.exp %138 : vector<2x128xf32>
    %cst_24 = arith.constant 1.000000e+00 : f32
    %140 = vector.broadcast %cst_24 : f32 to vector<2x128xf32>
    %141 = arith.addf %140, %139 : vector<2x128xf32>
    %142 = arith.divf %140, %141 : vector<2x128xf32>
    %143 = math.tanh %137 : vector<2x128xf32>
    %144 = vector.extract_strided_slice %142 {offsets = [0, 0], sizes = [2, 32], strides = [1, 1]} : vector<2x128xf32> to vector<2x32xf32>
    %145 = vector.extract_strided_slice %142 {offsets = [0, 32], sizes = [2, 32], strides = [1, 1]} : vector<2x128xf32> to vector<2x32xf32>
    %146 = vector.extract_strided_slice %143 {offsets = [0, 64], sizes = [2, 32], strides = [1, 1]} : vector<2x128xf32> to vector<2x32xf32>
    %147 = vector.extract_strided_slice %142 {offsets = [0, 96], sizes = [2, 32], strides = [1, 1]} : vector<2x128xf32> to vector<2x32xf32>
    %148 = arith.mulf %145, %132 : vector<2x32xf32>
    %149 = arith.mulf %144, %146 : vector<2x32xf32>
    %150 = arith.addf %148, %149 : vector<2x32xf32>
    %151 = math.tanh %150 : vector<2x32xf32>
    %152 = arith.mulf %147, %151 : vector<2x32xf32>
    %153 = tpu.concatenate %26, %44, %62, %80, %98, %116, %134, %152 in 0 : vector<2x32xf32>, vector<2x32xf32>, vector<2x32xf32>, vector<2x32xf32>, vector<2x32xf32>, vector<2x32xf32>, vector<2x32xf32>, vector<2x32xf32> -> vector<16x32xf32>
    %c0_25 = arith.constant 0 : index
    %c0_26 = arith.constant 0 : index
    %c0_27 = arith.constant 0 : index
    %154 = vector.load %arg10[%c0_25, %c0_26, %c0_27] : memref<2x2x32xf32, #tpu.memory_space<vmem>>, vector<1x2x32xf32>
    %155 = vector.shape_cast %154 : vector<1x2x32xf32> to vector<2x32xf32>
    %156 = vector.shape_cast %152 : vector<2x32xf32> to vector<1x2x32xf32>
    tpu.vector_store %arg10[%c0_25, %c0_26, %c0_27], %156 {strides = array<i32>} : memref<2x2x32xf32, #tpu.memory_space<vmem>>, vector<1x2x32xf32>,
    %c0_28 = arith.constant 0 : index
    %c0_29 = arith.constant 0 : index
    %c0_30 = arith.constant 0 : index
    %157 = vector.load %arg11[%c0_28, %c0_29, %c0_30] : memref<2x2x32xf32, #tpu.memory_space<vmem>>, vector<1x2x32xf32>
    %158 = vector.shape_cast %157 : vector<1x2x32xf32> to vector<2x32xf32>
    %159 = vector.shape_cast %150 : vector<2x32xf32> to vector<1x2x32xf32>
    tpu.vector_store %arg11[%c0_28, %c0_29, %c0_30], %159 {strides = array<i32>} : memref<2x2x32xf32, #tpu.memory_space<vmem>>, vector<1x2x32xf32>,
    %c0_31 = arith.constant 0 : index
    %c0_32 = arith.constant 0 : index
    %160 = vector.load %arg4[%c0_31, %c0_32] : memref<32x128xf32, #tpu.memory_space<vmem>>, vector<32x128xf32>
    %c0_33 = arith.constant 0 : index
    %c0_34 = arith.constant 0 : index
    %161 = vector.load %arg5[%c0_33, %c0_34] : memref<32x128xf32, #tpu.memory_space<vmem>>, vector<32x128xf32>
    %c0_35 = arith.constant 0 : index
    %c0_36 = arith.constant 0 : index
    %162 = vector.load %arg6[%c0_35, %c0_36] : memref<1x128xf32, #tpu.memory_space<vmem>>, vector<1x128xf32>
    %cst_37 = arith.constant dense<0.000000e+00> : vector<16x128xf32>
    %163 = tpu.matmul %153, %160, %cst_37 {dimension_numbers = #tpu.dot_dimension_numbers<[1], [0], [0], [1], [0, 0, 1, 1], [], []>} : vector<16x32xf32>, vector<32x128xf32>, vector<16x128xf32> -> vector<16x128xf32>
    %164 = vector.broadcast %162 : vector<1x128xf32> to vector<16x128xf32>
    %165 = arith.addf %163, %164 : vector<16x128xf32>
    %cst_38 = arith.constant 0.000000e+00 : f32
    %166 = vector.broadcast %cst_38 : f32 to vector<2x32xf32>
    %cst_39 = arith.constant 0.000000e+00 : f32
    %167 = vector.broadcast %cst_39 : f32 to vector<2x32xf32>
    %168 = vector.extract_strided_slice %165 {offsets = [0, 0], sizes = [2, 128], strides = [1, 1]} : vector<16x128xf32> to vector<2x128xf32>
    %cst_40 = arith.constant dense<0.000000e+00> : vector<2x128xf32>
    %169 = tpu.matmul %166, %161, %cst_40 {dimension_numbers = #tpu.dot_dimension_numbers<[1], [0], [0], [1], [0, 0, 1, 1], [], []>} : vector<2x32xf32>, vector<32x128xf32>, vector<2x128xf32> -> vector<2x128xf32>
    %170 = arith.addf %168, %169 : vector<2x128xf32>
    %171 = arith.negf %170 : vector<2x128xf32>
    %172 = math.exp %171 : vector<2x128xf32>
    %cst_41 = arith.constant 1.000000e+00 : f32
    %173 = vector.broadcast %cst_41 : f32 to vector<2x128xf32>
    %174 = arith.addf %173, %172 : vector<2x128xf32>
    %175 = arith.divf %173, %174 : vector<2x128xf32>
    %176 = math.tanh %170 : vector<2x128xf32>
    %177 = vector.extract_strided_slice %175 {offsets = [0, 0], sizes = [2, 32], strides = [1, 1]} : vector<2x128xf32> to vector<2x32xf32>
    %178 = vector.extract_strided_slice %175 {offsets = [0, 32], sizes = [2, 32], strides = [1, 1]} : vector<2x128xf32> to vector<2x32xf32>
    %179 = vector.extract_strided_slice %176 {offsets = [0, 64], sizes = [2, 32], strides = [1, 1]} : vector<2x128xf32> to vector<2x32xf32>
    %180 = vector.extract_strided_slice %175 {offsets = [0, 96], sizes = [2, 32], strides = [1, 1]} : vector<2x128xf32> to vector<2x32xf32>
    %181 = arith.mulf %178, %167 : vector<2x32xf32>
    %182 = arith.mulf %177, %179 : vector<2x32xf32>
    %183 = arith.addf %181, %182 : vector<2x32xf32>
    %184 = math.tanh %183 : vector<2x32xf32>
    %185 = arith.mulf %180, %184 : vector<2x32xf32>
    %186 = vector.extract_strided_slice %165 {offsets = [2, 0], sizes = [2, 128], strides = [1, 1]} : vector<16x128xf32> to vector<2x128xf32>
    %cst_42 = arith.constant dense<0.000000e+00> : vector<2x128xf32>
    %187 = tpu.matmul %185, %161, %cst_42 {dimension_numbers = #tpu.dot_dimension_numbers<[1], [0], [0], [1], [0, 0, 1, 1], [], []>} : vector<2x32xf32>, vector<32x128xf32>, vector<2x128xf32> -> vector<2x128xf32>
    %188 = arith.addf %186, %187 : vector<2x128xf32>
    %189 = arith.negf %188 : vector<2x128xf32>
    %190 = math.exp %189 : vector<2x128xf32>
    %cst_43 = arith.constant 1.000000e+00 : f32
    %191 = vector.broadcast %cst_43 : f32 to vector<2x128xf32>
    %192 = arith.addf %191, %190 : vector<2x128xf32>
    %193 = arith.divf %191, %192 : vector<2x128xf32>
    %194 = math.tanh %188 : vector<2x128xf32>
    %195 = vector.extract_strided_slice %193 {offsets = [0, 0], sizes = [2, 32], strides = [1, 1]} : vector<2x128xf32> to vector<2x32xf32>
    %196 = vector.extract_strided_slice %193 {offsets = [0, 32], sizes = [2, 32], strides = [1, 1]} : vector<2x128xf32> to vector<2x32xf32>
    %197 = vector.extract_strided_slice %194 {offsets = [0, 64], sizes = [2, 32], strides = [1, 1]} : vector<2x128xf32> to vector<2x32xf32>
    %198 = vector.extract_strided_slice %193 {offsets = [0, 96], sizes = [2, 32], strides = [1, 1]} : vector<2x128xf32> to vector<2x32xf32>
    %199 = arith.mulf %196, %183 : vector<2x32xf32>
    %200 = arith.mulf %195, %197 : vector<2x32xf32>
    %201 = arith.addf %199, %200 : vector<2x32xf32>
    %202 = math.tanh %201 : vector<2x32xf32>
    %203 = arith.mulf %198, %202 : vector<2x32xf32>
    %204 = vector.extract_strided_slice %165 {offsets = [4, 0], sizes = [2, 128], strides = [1, 1]} : vector<16x128xf32> to vector<2x128xf32>
    %cst_44 = arith.constant dense<0.000000e+00> : vector<2x128xf32>
    %205 = tpu.matmul %203, %161, %cst_44 {dimension_numbers = #tpu.dot_dimension_numbers<[1], [0], [0], [1], [0, 0, 1, 1], [], []>} : vector<2x32xf32>, vector<32x128xf32>, vector<2x128xf32> -> vector<2x128xf32>
    %206 = arith.addf %204, %205 : vector<2x128xf32>
    %207 = arith.negf %206 : vector<2x128xf32>
    %208 = math.exp %207 : vector<2x128xf32>
    %cst_45 = arith.constant 1.000000e+00 : f32
    %209 = vector.broadcast %cst_45 : f32 to vector<2x128xf32>
    %210 = arith.addf %209, %208 : vector<2x128xf32>
    %211 = arith.divf %209, %210 : vector<2x128xf32>
    %212 = math.tanh %206 : vector<2x128xf32>
    %213 = vector.extract_strided_slice %211 {offsets = [0, 0], sizes = [2, 32], strides = [1, 1]} : vector<2x128xf32> to vector<2x32xf32>
    %214 = vector.extract_strided_slice %211 {offsets = [0, 32], sizes = [2, 32], strides = [1, 1]} : vector<2x128xf32> to vector<2x32xf32>
    %215 = vector.extract_strided_slice %212 {offsets = [0, 64], sizes = [2, 32], strides = [1, 1]} : vector<2x128xf32> to vector<2x32xf32>
    %216 = vector.extract_strided_slice %211 {offsets = [0, 96], sizes = [2, 32], strides = [1, 1]} : vector<2x128xf32> to vector<2x32xf32>
    %217 = arith.mulf %214, %201 : vector<2x32xf32>
    %218 = arith.mulf %213, %215 : vector<2x32xf32>
    %219 = arith.addf %217, %218 : vector<2x32xf32>
    %220 = math.tanh %219 : vector<2x32xf32>
    %221 = arith.mulf %216, %220 : vector<2x32xf32>
    %222 = vector.extract_strided_slice %165 {offsets = [6, 0], sizes = [2, 128], strides = [1, 1]} : vector<16x128xf32> to vector<2x128xf32>
    %cst_46 = arith.constant dense<0.000000e+00> : vector<2x128xf32>
    %223 = tpu.matmul %221, %161, %cst_46 {dimension_numbers = #tpu.dot_dimension_numbers<[1], [0], [0], [1], [0, 0, 1, 1], [], []>} : vector<2x32xf32>, vector<32x128xf32>, vector<2x128xf32> -> vector<2x128xf32>
    %224 = arith.addf %222, %223 : vector<2x128xf32>
    %225 = arith.negf %224 : vector<2x128xf32>
    %226 = math.exp %225 : vector<2x128xf32>
    %cst_47 = arith.constant 1.000000e+00 : f32
    %227 = vector.broadcast %cst_47 : f32 to vector<2x128xf32>
    %228 = arith.addf %227, %226 : vector<2x128xf32>
    %229 = arith.divf %227, %228 : vector<2x128xf32>
    %230 = math.tanh %224 : vector<2x128xf32>
    %231 = vector.extract_strided_slice %229 {offsets = [0, 0], sizes = [2, 32], strides = [1, 1]} : vector<2x128xf32> to vector<2x32xf32>
    %232 = vector.extract_strided_slice %229 {offsets = [0, 32], sizes = [2, 32], strides = [1, 1]} : vector<2x128xf32> to vector<2x32xf32>
    %233 = vector.extract_strided_slice %230 {offsets = [0, 64], sizes = [2, 32], strides = [1, 1]} : vector<2x128xf32> to vector<2x32xf32>
    %234 = vector.extract_strided_slice %229 {offsets = [0, 96], sizes = [2, 32], strides = [1, 1]} : vector<2x128xf32> to vector<2x32xf32>
    %235 = arith.mulf %232, %219 : vector<2x32xf32>
    %236 = arith.mulf %231, %233 : vector<2x32xf32>
    %237 = arith.addf %235, %236 : vector<2x32xf32>
    %238 = math.tanh %237 : vector<2x32xf32>
    %239 = arith.mulf %234, %238 : vector<2x32xf32>
    %240 = vector.extract_strided_slice %165 {offsets = [8, 0], sizes = [2, 128], strides = [1, 1]} : vector<16x128xf32> to vector<2x128xf32>
    %cst_48 = arith.constant dense<0.000000e+00> : vector<2x128xf32>
    %241 = tpu.matmul %239, %161, %cst_48 {dimension_numbers = #tpu.dot_dimension_numbers<[1], [0], [0], [1], [0, 0, 1, 1], [], []>} : vector<2x32xf32>, vector<32x128xf32>, vector<2x128xf32> -> vector<2x128xf32>
    %242 = arith.addf %240, %241 : vector<2x128xf32>
    %243 = arith.negf %242 : vector<2x128xf32>
    %244 = math.exp %243 : vector<2x128xf32>
    %cst_49 = arith.constant 1.000000e+00 : f32
    %245 = vector.broadcast %cst_49 : f32 to vector<2x128xf32>
    %246 = arith.addf %245, %244 : vector<2x128xf32>
    %247 = arith.divf %245, %246 : vector<2x128xf32>
    %248 = math.tanh %242 : vector<2x128xf32>
    %249 = vector.extract_strided_slice %247 {offsets = [0, 0], sizes = [2, 32], strides = [1, 1]} : vector<2x128xf32> to vector<2x32xf32>
    %250 = vector.extract_strided_slice %247 {offsets = [0, 32], sizes = [2, 32], strides = [1, 1]} : vector<2x128xf32> to vector<2x32xf32>
    %251 = vector.extract_strided_slice %248 {offsets = [0, 64], sizes = [2, 32], strides = [1, 1]} : vector<2x128xf32> to vector<2x32xf32>
    %252 = vector.extract_strided_slice %247 {offsets = [0, 96], sizes = [2, 32], strides = [1, 1]} : vector<2x128xf32> to vector<2x32xf32>
    %253 = arith.mulf %250, %237 : vector<2x32xf32>
    %254 = arith.mulf %249, %251 : vector<2x32xf32>
    %255 = arith.addf %253, %254 : vector<2x32xf32>
    %256 = math.tanh %255 : vector<2x32xf32>
    %257 = arith.mulf %252, %256 : vector<2x32xf32>
    %258 = vector.extract_strided_slice %165 {offsets = [10, 0], sizes = [2, 128], strides = [1, 1]} : vector<16x128xf32> to vector<2x128xf32>
    %cst_50 = arith.constant dense<0.000000e+00> : vector<2x128xf32>
    %259 = tpu.matmul %257, %161, %cst_50 {dimension_numbers = #tpu.dot_dimension_numbers<[1], [0], [0], [1], [0, 0, 1, 1], [], []>} : vector<2x32xf32>, vector<32x128xf32>, vector<2x128xf32> -> vector<2x128xf32>
    %260 = arith.addf %258, %259 : vector<2x128xf32>
    %261 = arith.negf %260 : vector<2x128xf32>
    %262 = math.exp %261 : vector<2x128xf32>
    %cst_51 = arith.constant 1.000000e+00 : f32
    %263 = vector.broadcast %cst_51 : f32 to vector<2x128xf32>
    %264 = arith.addf %263, %262 : vector<2x128xf32>
    %265 = arith.divf %263, %264 : vector<2x128xf32>
    %266 = math.tanh %260 : vector<2x128xf32>
    %267 = vector.extract_strided_slice %265 {offsets = [0, 0], sizes = [2, 32], strides = [1, 1]} : vector<2x128xf32> to vector<2x32xf32>
    %268 = vector.extract_strided_slice %265 {offsets = [0, 32], sizes = [2, 32], strides = [1, 1]} : vector<2x128xf32> to vector<2x32xf32>
    %269 = vector.extract_strided_slice %266 {offsets = [0, 64], sizes = [2, 32], strides = [1, 1]} : vector<2x128xf32> to vector<2x32xf32>
    %270 = vector.extract_strided_slice %265 {offsets = [0, 96], sizes = [2, 32], strides = [1, 1]} : vector<2x128xf32> to vector<2x32xf32>
    %271 = arith.mulf %268, %255 : vector<2x32xf32>
    %272 = arith.mulf %267, %269 : vector<2x32xf32>
    %273 = arith.addf %271, %272 : vector<2x32xf32>
    %274 = math.tanh %273 : vector<2x32xf32>
    %275 = arith.mulf %270, %274 : vector<2x32xf32>
    %276 = vector.extract_strided_slice %165 {offsets = [12, 0], sizes = [2, 128], strides = [1, 1]} : vector<16x128xf32> to vector<2x128xf32>
    %cst_52 = arith.constant dense<0.000000e+00> : vector<2x128xf32>
    %277 = tpu.matmul %275, %161, %cst_52 {dimension_numbers = #tpu.dot_dimension_numbers<[1], [0], [0], [1], [0, 0, 1, 1], [], []>} : vector<2x32xf32>, vector<32x128xf32>, vector<2x128xf32> -> vector<2x128xf32>
    %278 = arith.addf %276, %277 : vector<2x128xf32>
    %279 = arith.negf %278 : vector<2x128xf32>
    %280 = math.exp %279 : vector<2x128xf32>
    %cst_53 = arith.constant 1.000000e+00 : f32
    %281 = vector.broadcast %cst_53 : f32 to vector<2x128xf32>
    %282 = arith.addf %281, %280 : vector<2x128xf32>
    %283 = arith.divf %281, %282 : vector<2x128xf32>
    %284 = math.tanh %278 : vector<2x128xf32>
    %285 = vector.extract_strided_slice %283 {offsets = [0, 0], sizes = [2, 32], strides = [1, 1]} : vector<2x128xf32> to vector<2x32xf32>
    %286 = vector.extract_strided_slice %283 {offsets = [0, 32], sizes = [2, 32], strides = [1, 1]} : vector<2x128xf32> to vector<2x32xf32>
    %287 = vector.extract_strided_slice %284 {offsets = [0, 64], sizes = [2, 32], strides = [1, 1]} : vector<2x128xf32> to vector<2x32xf32>
    %288 = vector.extract_strided_slice %283 {offsets = [0, 96], sizes = [2, 32], strides = [1, 1]} : vector<2x128xf32> to vector<2x32xf32>
    %289 = arith.mulf %286, %273 : vector<2x32xf32>
    %290 = arith.mulf %285, %287 : vector<2x32xf32>
    %291 = arith.addf %289, %290 : vector<2x32xf32>
    %292 = math.tanh %291 : vector<2x32xf32>
    %293 = arith.mulf %288, %292 : vector<2x32xf32>
    %294 = vector.extract_strided_slice %165 {offsets = [14, 0], sizes = [2, 128], strides = [1, 1]} : vector<16x128xf32> to vector<2x128xf32>
    %cst_54 = arith.constant dense<0.000000e+00> : vector<2x128xf32>
    %295 = tpu.matmul %293, %161, %cst_54 {dimension_numbers = #tpu.dot_dimension_numbers<[1], [0], [0], [1], [0, 0, 1, 1], [], []>} : vector<2x32xf32>, vector<32x128xf32>, vector<2x128xf32> -> vector<2x128xf32>
    %296 = arith.addf %294, %295 : vector<2x128xf32>
    %297 = arith.negf %296 : vector<2x128xf32>
    %298 = math.exp %297 : vector<2x128xf32>
    %cst_55 = arith.constant 1.000000e+00 : f32
    %299 = vector.broadcast %cst_55 : f32 to vector<2x128xf32>
    %300 = arith.addf %299, %298 : vector<2x128xf32>
    %301 = arith.divf %299, %300 : vector<2x128xf32>
    %302 = math.tanh %296 : vector<2x128xf32>
    %303 = vector.extract_strided_slice %301 {offsets = [0, 0], sizes = [2, 32], strides = [1, 1]} : vector<2x128xf32> to vector<2x32xf32>
    %304 = vector.extract_strided_slice %301 {offsets = [0, 32], sizes = [2, 32], strides = [1, 1]} : vector<2x128xf32> to vector<2x32xf32>
    %305 = vector.extract_strided_slice %302 {offsets = [0, 64], sizes = [2, 32], strides = [1, 1]} : vector<2x128xf32> to vector<2x32xf32>
    %306 = vector.extract_strided_slice %301 {offsets = [0, 96], sizes = [2, 32], strides = [1, 1]} : vector<2x128xf32> to vector<2x32xf32>
    %307 = arith.mulf %304, %291 : vector<2x32xf32>
    %308 = arith.mulf %303, %305 : vector<2x32xf32>
    %309 = arith.addf %307, %308 : vector<2x32xf32>
    %310 = math.tanh %309 : vector<2x32xf32>
    %311 = arith.mulf %306, %310 : vector<2x32xf32>
    %c1 = arith.constant 1 : index
    %c0_56 = arith.constant 0 : index
    %c0_57 = arith.constant 0 : index
    %312 = vector.load %arg10[%c1, %c0_56, %c0_57] : memref<2x2x32xf32, #tpu.memory_space<vmem>>, vector<1x2x32xf32>
    %313 = vector.shape_cast %312 : vector<1x2x32xf32> to vector<2x32xf32>
    %314 = vector.shape_cast %311 : vector<2x32xf32> to vector<1x2x32xf32>
    tpu.vector_store %arg10[%c1, %c0_56, %c0_57], %314 {strides = array<i32>} : memref<2x2x32xf32, #tpu.memory_space<vmem>>, vector<1x2x32xf32>,
    %c1_58 = arith.constant 1 : index
    %c0_59 = arith.constant 0 : index
    %c0_60 = arith.constant 0 : index
    %315 = vector.load %arg11[%c1_58, %c0_59, %c0_60] : memref<2x2x32xf32, #tpu.memory_space<vmem>>, vector<1x2x32xf32>
    %316 = vector.shape_cast %315 : vector<1x2x32xf32> to vector<2x32xf32>
    %317 = vector.shape_cast %309 : vector<2x32xf32> to vector<1x2x32xf32>
    tpu.vector_store %arg11[%c1_58, %c0_59, %c0_60], %317 {strides = array<i32>} : memref<2x2x32xf32, #tpu.memory_space<vmem>>, vector<1x2x32xf32>,
    %cst_61 = arith.constant 0.000000e+00 : f32
    %318 = vector.broadcast %cst_61 : f32 to vector<2x32xf32>
    %319 = arith.maximumf %311, %318 : vector<2x32xf32>
    %c0_62 = arith.constant 0 : index
    %c0_63 = arith.constant 0 : index
    %320 = vector.load %arg7[%c0_62, %c0_63] : memref<32x3xf32, #tpu.memory_space<vmem>>, vector<32x3xf32>
    %cst_64 = arith.constant dense<0.000000e+00> : vector<2x3xf32>
    %321 = tpu.matmul %319, %320, %cst_64 {dimension_numbers = #tpu.dot_dimension_numbers<[1], [0], [0], [1], [0, 0, 1, 1], [], []>} : vector<2x32xf32>, vector<32x3xf32>, vector<2x3xf32> -> vector<2x3xf32>
    %c0_65 = arith.constant 0 : index
    %c0_66 = arith.constant 0 : index
    %322 = vector.load %arg8[%c0_65, %c0_66] : memref<1x3xf32, #tpu.memory_space<vmem>>, vector<1x3xf32>
    %323 = vector.broadcast %322 : vector<1x3xf32> to vector<2x3xf32>
    %324 = arith.addf %321, %323 : vector<2x3xf32>
    %c0_67 = arith.constant 0 : index
    %c0_68 = arith.constant 0 : index
    %325 = vector.load %arg9[%c0_67, %c0_68] : memref<2x3xf32, #tpu.memory_space<vmem>>, vector<2x3xf32>
    tpu.vector_store %arg9[%c0_67, %c0_68], %324 {strides = array<i32>} : memref<2x3xf32, #tpu.memory_space<vmem>>, vector<2x3xf32>,
    return
  }
}

</mosaic_0001>

<llo_original>
// kernel: rnn_forward.1
$region0: #{rnn_forward.1}
  #allocation0 [shape = 'u32[]', space=smem, size = 0x4, offset = 0x4, fixed_abs, tag = 'smem constant byte address 0x4 - core index']
  #allocation1 [shape = 'u32[144,128]{1,0:T(1,128)}', space=vmem, size = 0x12000, scoped, tag = 'internal scratch']
  %s0 = inlined_call_operand.vmem [shape: f32[16,16], index: 0, kind: input, shape index: {}]
  %s1 = inlined_call_operand.hbm [shape: f32[16,128], index: 1, kind: input, shape index: {}]
  %s2 = inlined_call_operand.vmem [shape: f32[32,128], index: 2, kind: input, shape index: {}]
  %s3 = inlined_call_operand.vmem [shape: f32[1,128], index: 3, kind: input, shape index: {}]
  %s4 = inlined_call_operand.vmem [shape: f32[32,128], index: 4, kind: input, shape index: {}]
  %s5 = inlined_call_operand.hbm [shape: f32[32,128], index: 5, kind: input, shape index: {}]
  %s6 = inlined_call_operand.vmem [shape: f32[1,128], index: 6, kind: input, shape index: {}]
  %s7 = inlined_call_operand.vmem [shape: f32[32,3], index: 7, kind: input, shape index: {}]
  %s8 = inlined_call_operand.hbm [shape: f32[1,3], index: 8, kind: input, shape index: {}]
  %s9 = inlined_call_operand.hbm [shape: f32[2,3], index: 9, kind: output, shape index: {0}]
  %s10 = inlined_call_operand.hbm [shape: f32[2,2,32], index: 10, kind: output, shape index: {1}]
  %s11 = inlined_call_operand.hbm [shape: f32[2,2,32], index: 11, kind: output, shape index: {2}]
  %12 = xla_tuple %s9, %s10, %s11
  %s13 = sld [smem:[#allocation0]]
  $region74: #{rnn_forward.1} parent=0
    _
  %s15 = ssub.s32 1, %s13
  %s16 = scalar_select 0, %s15, %s13
  $region1: #{rnn_forward.1} parent=0
    #allocation2 [shape = 'u8[8192]{0}', space=vmem, size = 0x2000, scoped, tag = 'input window, operand 1, single buffered']
    #allocation3 [shape = 's32[1]{0}', space=sflag, size = 0x4, scoped, tag = 'scoped memory for rnn_forward.1']
    #allocation4 [shape = 's32[1]{0}', space=sflag, size = 0x4, scoped, tag = 'scoped memory for rnn_forward.1']
    #allocation5 [shape = 'u8[16384]{0}', space=vmem, size = 0x4000, scoped, tag = 'input window, operand 5, single buffered']
    #allocation6 [shape = 's32[1]{0}', space=sflag, size = 0x4, scoped, tag = 'scoped memory for rnn_forward.1']
    #allocation7 [shape = 'u8[512]{0}', space=vmem, size = 0x400, scoped, tag = 'input window, operand 8, single buffered']
    #allocation8 [shape = 'u8[1024]{0}', space=vmem, size = 0x400, scoped, tag = 'output window, operand 0, single buffered']
    #allocation9 [shape = 'u8[2048]{0}', space=vmem, size = 0x800, scoped, tag = 'output window, operand 1, single buffered']
    #allocation10 [shape = 's32[1]{0}', space=sflag, size = 0x4, scoped, tag = 'scoped memory for rnn_forward.1']
    #allocation11 [shape = 'u8[2048]{0}', space=vmem, size = 0x800, scoped, tag = 'output window, operand 2, single buffered']
    %17 = vsyncpa [#allocation3], 0
    %18 = vsyncpa [#allocation6], 0
    %19 = vsyncpa [#allocation4], 0
    %20 = vsyncpa [#allocation10], 0
    // Predicated region
    $region2: #{rnn_forward.1} parent=1 // pred_check
      _
    $region3: #{rnn_forward.1} parent=1 // pred_check_branch
      %22 = sbr.rel (0) target = $region5
    $region4: #{rnn_forward.1} parent=1 // pred_region
      _
    $region5: #{rnn_forward.1} parent=1 // pred_fallthru
      _
    // Predicated region
    $region6: #{rnn_forward.1} parent=1 // pred_check
      _
    $region7: #{rnn_forward.1} parent=1 // pred_check_branch
      %24 = sbr.rel (0) target = $region9
    $region8: #{rnn_forward.1} parent=1 // pred_region
      %s26 = ssub.s32 256, 256
      %27 = vsyncadd [#allocation3], %s26
      %s28 = sshll.u32 [#allocation2], 4
      %s29 = int_to_ptr.vmem [resolvable:$true] %s28
      %34 = dma.hbm_to_vmem [thread:$0]  %s1, 256, %s29, [#allocation3], 128, 128, 8
    $region9: #{rnn_forward.1} parent=1 // pred_fallthru
      _
    // Predicated region
    $region10: #{rnn_forward.1} parent=1 // pred_check
      _
    $region11: #{rnn_forward.1} parent=1 // pred_check_branch
      %36 = sbr.rel (0) target = $region13
    $region12: #{rnn_forward.1} parent=1 // pred_region
      _
    $region13: #{rnn_forward.1} parent=1 // pred_fallthru
      _
    // Predicated region
    $region14: #{rnn_forward.1} parent=1 // pred_check
      _
    $region15: #{rnn_forward.1} parent=1 // pred_check_branch
      %38 = sbr.rel (0) target = $region17
    $region16: #{rnn_forward.1} parent=1 // pred_region
      _
    $region17: #{rnn_forward.1} parent=1 // pred_fallthru
      _
    // Predicated region
    $region18: #{rnn_forward.1} parent=1 // pred_check
      _
    $region19: #{rnn_forward.1} parent=1 // pred_check_branch
      %40 = sbr.rel (0) target = $region21
    $region20: #{rnn_forward.1} parent=1 // pred_region
      _
    $region21: #{rnn_forward.1} parent=1 // pred_fallthru
      _
    // Predicated region
    $region22: #{rnn_forward.1} parent=1 // pred_check
      _
    $region23: #{rnn_forward.1} parent=1 // pred_check_branch
      %42 = sbr.rel (0) target = $region25
    $region24: #{rnn_forward.1} parent=1 // pred_region
      %s44 = ssub.s32 512, 512
      %45 = vsyncadd [#allocation6], %s44
      %s46 = sshll.u32 [#allocation5], 4
      %s47 = int_to_ptr.vmem [resolvable:$true] %s46
      %52 = dma.hbm_to_vmem [thread:$0]  %s5, 512, %s47, [#allocation6], 128, 128, 8
    $region25: #{rnn_forward.1} parent=1 // pred_fallthru
      _
    // Predicated region
    $region26: #{rnn_forward.1} parent=1 // pred_check
      _
    $region27: #{rnn_forward.1} parent=1 // pred_check_branch
      %54 = sbr.rel (0) target = $region29
    $region28: #{rnn_forward.1} parent=1 // pred_region
      _
    $region29: #{rnn_forward.1} parent=1 // pred_fallthru
      _
    // Predicated region
    $region30: #{rnn_forward.1} parent=1 // pred_check
      _
    $region31: #{rnn_forward.1} parent=1 // pred_check_branch
      %56 = sbr.rel (0) target = $region33
    $region32: #{rnn_forward.1} parent=1 // pred_region
      _
    $region33: #{rnn_forward.1} parent=1 // pred_fallthru
      _
    // Predicated region
    $region34: #{rnn_forward.1} parent=1 // pred_check
      _
    $region35: #{rnn_forward.1} parent=1 // pred_check_branch
      %58 = sbr.rel (0) target = $region37
    $region36: #{rnn_forward.1} parent=1 // pred_region
      %s60 = ssub.s32 16, 16
      %61 = vsyncadd [#allocation6], %s60
      %s63 = sshll.u32 [#allocation7], 4
      %s64 = int_to_ptr.vmem [resolvable:$true] %s63
      %66 = dma.hbm_to_vmem [thread:$0]  %s8, 16, %s64, [#allocation6]
    $region37: #{rnn_forward.1} parent=1 // pred_fallthru
      _
    // Predicated region
    $region38: #{rnn_forward.1} parent=1 // pred_check
      _
    $region39: #{rnn_forward.1} parent=1 // pred_check_branch
      %68 = sbr.rel (0) target = $region41
    $region40: #{rnn_forward.1} parent=1 // pred_region
      %69 = dma.done [#allocation3], 256
    $region41: #{rnn_forward.1} parent=1 // pred_fallthru
      _
    // Predicated region
    $region42: #{rnn_forward.1} parent=1 // pred_check
      _
    $region43: #{rnn_forward.1} parent=1 // pred_check_branch
      %71 = sbr.rel (0) target = $region45
    $region44: #{rnn_forward.1} parent=1 // pred_region
      %72 = dma.done [#allocation6], 512
    $region45: #{rnn_forward.1} parent=1 // pred_fallthru
      _
    // Predicated region
    $region46: #{rnn_forward.1} parent=1 // pred_check
      _
    $region47: #{rnn_forward.1} parent=1 // pred_check_branch
      %74 = sbr.rel (0) target = $region49
    $region48: #{rnn_forward.1} parent=1 // pred_region
      %75 = dma.done [#allocation6], 16
    $region49: #{rnn_forward.1} parent=1 // pred_fallthru
      _
    %v76 = vld [vmem:[%s0] sm:$0xff]
    %v77 = vld [vmem:[%s0 + $0x8] sm:$0xff]
    %v78 = vld [vmem:[#allocation2] sm:$0xff]
    %v79 = vld [vmem:[#allocation2 + $0x8] sm:$0xff]
    %v80 = vld [vmem:[%s2] sm:$0xff]
    %v81 = vld [vmem:[%s2 + $0x8] sm:$0xff]
    %v82 = vld [vmem:[%s2 + $0x10] sm:$0xff]
    %v83 = vld [vmem:[%s2 + $0x18] sm:$0xff]
    %v84 = vld [vmem:[%s3] sm:$0x1]
    %v86 = vlaneseq
    %v87 = vshrl.u32 %v86, 7
    %v88 = vsub.s32 0, %v87
    %v89 = vrot.slane %v84, %v88
    %vm91 = vcmask 130048
    %v93 = vsel %vm91, %v76, 0
    %v96 = vsel %vm91, %v77, 0
    %98 = vmatprep.subr.mxu0 0.0
    %99 = vmatpush1.msra.mxu0 0.0
    %100 = vmatprep.subr.mxu0 0.0
    %101 = vmatpush1.msra.mxu0 0.0
    %102 = vmatprep.subr.mxu0 0.0
    %103 = vmatpush1.msra.mxu0 0.0
    %104 = vmatprep.subr.mxu0 0.0
    %105 = vmatpush1.msra.mxu0 0.0
    %106 = vmatprep.subr.mxu0 0.0
    %107 = vmatpush1.msra.mxu0 0.0
    %108 = vmatprep.subr.mxu0 0.0
    %109 = vmatpush1.msra.mxu0 0.0
    %110 = vmatprep.subr.mxu0 0.0
    %111 = vmatpush1.msra.mxu0 0.0
    %112 = vmatprep.subr.mxu0 0.0
    %113 = vmatpush1.msra.mxu0 0.0
    %114 = vmatprep.subr.mxu0 0.0
    %115 = vmatpush1.msra.mxu0 0.0
    %116 = vmatprep.subr.mxu0 0.0
    %117 = vmatpush1.msra.mxu0 0.0
    %118 = vmatprep.subr.mxu0 0.0
    %119 = vmatpush1.msra.mxu0 0.0
    %120 = vmatprep.subr.mxu0 0.0
    %121 = vmatpush1.msra.mxu0 0.0
    %122 = vmatprep.subr.mxu0 0.0
    %123 = vmatpush1.msra.mxu0 0.0
    %124 = vmatprep.subr.mxu0 0.0
    %125 = vmatpush1.msra.mxu0 0.0
    %126 = vmatprep.subr.mxu0 0.0
    %127 = vmatpush1.msra.mxu0 %v79
    %128 = vmatprep.subr.mxu0 0.0
    %129 = vmatpush1.msra.mxu0 %v78
    %130 = vmatprep.subr.mxu0 0.0
    %131 = vmatpush2.msra.mxu0 0.0
    %132 = vmatprep.subr.mxu0 0.0
    %133 = vmatpush2.msra.mxu0 0.0
    %134 = vmatprep.subr.mxu0 0.0
    %135 = vmatpush2.msra.mxu0 0.0
    %136 = vmatprep.subr.mxu0 0.0
    %137 = vmatpush2.msra.mxu0 0.0
    %138 = vmatprep.subr.mxu0 0.0
    %139 = vmatpush2.msra.mxu0 0.0
    %140 = vmatprep.subr.mxu0 0.0
    %141 = vmatpush2.msra.mxu0 0.0
    %142 = vmatprep.subr.mxu0 0.0
    %143 = vmatpush2.msra.mxu0 0.0
    %144 = vmatprep.subr.mxu0 0.0
    %145 = vmatpush2.msra.mxu0 0.0
    %146 = vmatprep.subr.mxu0 0.0
    %147 = vmatpush2.msra.mxu0 0.0
    %148 = vmatprep.subr.mxu0 0.0
    %149 = vmatpush2.msra.mxu0 0.0
    %150 = vmatprep.subr.mxu0 0.0
    %151 = vmatpush2.msra.mxu0 0.0
    %152 = vmatprep.subr.mxu0 0.0
    %153 = vmatpush2.msra.mxu0 0.0
    %154 = vmatprep.subr.mxu0 0.0
    %155 = vmatpush2.msra.mxu0 0.0
    %156 = vmatprep.subr.mxu0 0.0
    %157 = vmatpush2.msra.mxu0 0.0
    %158 = vmatprep.subr.mxu0 0.0
    %159 = vmatpush2.msra.mxu0 0.0
    %160 = vmatprep.subr.mxu0 0.0
    %161 = vmatpush2.msra.mxu0 0.0
    %162 = vmatprep.mubr.f32.mxu0 0.0
    %163 = vmatmul.mubr.f32.gmra.mxu0 %v93
    %v164 = vpop.f32.mrf.mxu0
    %v165 = vadd.f32 %v89, %v164
    %v166 = vpop.f32.mrf.mxu0
    %167 = vmatprep.mubr.f32.mxu0 0.0
    %168 = vmatmul.mubr.f32.gmra.mxu0 %v96
    %v169 = vpop.f32.mrf.mxu0
    %v170 = vadd.f32 %v89, %v169
    %v171 = vpop.f32.mrf.mxu0
    %172 = vdwg.mxu0
    %vm173 = vcmask 261120
    %v175 = vsel %vm173, 0.0, 0
    %177 = vmatprep.subr.mxu0 0.0
    %178 = vmatpush1.msra.mxu0 0.0
    %179 = vmatprep.subr.mxu0 0.0
    %180 = vmatpush1.msra.mxu0 0.0
    %181 = vmatprep.subr.mxu0 0.0
    %182 = vmatpush1.msra.mxu0 0.0
    %183 = vmatprep.subr.mxu0 0.0
    %184 = vmatpush1.msra.mxu0 0.0
    %185 = vmatprep.subr.mxu0 0.0
    %186 = vmatpush1.msra.mxu0 0.0
    %187 = vmatprep.subr.mxu0 0.0
    %188 = vmatpush1.msra.mxu0 0.0
    %189 = vmatprep.subr.mxu0 0.0
    %190 = vmatpush1.msra.mxu0 0.0
    %191 = vmatprep.subr.mxu0 0.0
    %192 = vmatpush1.msra.mxu0 0.0
    %193 = vmatprep.subr.mxu0 0.0
    %194 = vmatpush1.msra.mxu0 0.0
    %195 = vmatprep.subr.mxu0 0.0
    %196 = vmatpush1.msra.mxu0 0.0
    %197 = vmatprep.subr.mxu0 0.0
    %198 = vmatpush1.msra.mxu0 0.0
    %199 = vmatprep.subr.mxu0 0.0
    %200 = vmatpush1.msra.mxu0 0.0
    %201 = vmatprep.subr.mxu0 0.0
    %202 = vmatpush1.msra.mxu0 %v83
    %203 = vmatprep.subr.mxu0 0.0
    %204 = vmatpush1.msra.mxu0 %v82
    %205 = vmatprep.subr.mxu0 0.0
    %206 = vmatpush1.msra.mxu0 %v81
    %207 = vmatprep.subr.mxu0 0.0
    %208 = vmatpush1.msra.mxu0 %v80
    %209 = vmatprep.subr.mxu0 0.0
    %210 = vmatpush2.msra.mxu0 0.0
    %211 = vmatprep.subr.mxu0 0.0
    %212 = vmatpush2.msra.mxu0 0.0
    %213 = vmatprep.subr.mxu0 0.0
    %214 = vmatpush2.msra.mxu0 0.0
    %215 = vmatprep.subr.mxu0 0.0
    %216 = vmatpush2.msra.mxu0 0.0
    %217 = vmatprep.subr.mxu0 0.0
    %218 = vmatpush2.msra.mxu0 0.0
    %219 = vmatprep.subr.mxu0 0.0
    %220 = vmatpush2.msra.mxu0 0.0
    %221 = vmatprep.subr.mxu0 0.0
    %222 = vmatpush2.msra.mxu0 0.0
    %223 = vmatprep.subr.mxu0 0.0
    %224 = vmatpush2.msra.mxu0 0.0
    %225 = vmatprep.subr.mxu0 0.0
    %226 = vmatpush2.msra.mxu0 0.0
    %227 = vmatprep.subr.mxu0 0.0
    %228 = vmatpush2.msra.mxu0 0.0
    %229 = vmatprep.subr.mxu0 0.0
    %230 = vmatpush2.msra.mxu0 0.0
    %231 = vmatprep.subr.mxu0 0.0
    %232 = vmatpush2.msra.mxu0 0.0
    %233 = vmatprep.subr.mxu0 0.0
    %234 = vmatpush2.msra.mxu0 0.0
    %235 = vmatprep.subr.mxu0 0.0
    %236 = vmatpush2.msra.mxu0 0.0
    %237 = vmatprep.subr.mxu0 0.0
    %238 = vmatpush2.msra.mxu0 0.0
    %239 = vmatprep.subr.mxu0 0.0
    %240 = vmatpush2.msra.mxu0 0.0
    %241 = vmatprep.mubr.f32.mxu0 0.0
    %242 = vmatmul.mubr.f32.gmra.mxu0 %v175
    %v243 = vpop.f32.mrf.mxu0
    %v244 = vadd.f32 0.0, %v243
    %v245 = vpop.f32.mrf.mxu0
    %246 = vdwg.mxu0
    %v247 = vadd.f32 %v165, %v244
    %v248 = vxor.u32 %v247, 2147483648
    %v249 = vmul.f32 %v248, 1.442695
    %v250 = vpow.pop %v249
    %v251 = vadd.f32 %v250, 1.0
    %v252 = vrcp.pop %v251
    %v253 = vmul.f32 1.0, %v252
    %v254 = vtanh.pop %v247
    %v255 = vmul.f32 %v253, 0.0
    %257 = vrot.lane.b32.xlu0 %v254, 64
    %v258 = vpop.permute.xlu0 %257
    %v260 = vmul.f32 %v253, %v258
    %262 = vrot.lane.b32.xlu0 %v260, 32
    %v263 = vpop.permute.xlu0 %262
    %v265 = vadd.f32 %v255, %v263
    %v266 = vtanh.pop %v265
    %268 = vrot.lane.b32.xlu0 %v266, 64
    %v269 = vpop.permute.xlu0 %268
    %v271 = vmul.f32 %v253, %v269
    %273 = vrot.lane.b32.xlu0 %v271, 32
    %v274 = vpop.permute.xlu0 %273
    %v275 = vsel %vm173, %v274, 0
    %277 = vmatprep.subr.mxu0 0.0
    %278 = vmatpush1.msra.mxu0 0.0
    %279 = vmatprep.subr.mxu0 0.0
    %280 = vmatpush1.msra.mxu0 0.0
    %281 = vmatprep.subr.mxu0 0.0
    %282 = vmatpush1.msra.mxu0 0.0
    %283 = vmatprep.subr.mxu0 0.0
    %284 = vmatpush1.msra.mxu0 0.0
    %285 = vmatprep.subr.mxu0 0.0
    %286 = vmatpush1.msra.mxu0 0.0
    %287 = vmatprep.subr.mxu0 0.0
    %288 = vmatpush1.msra.mxu0 0.0
    %289 = vmatprep.subr.mxu0 0.0
    %290 = vmatpush1.msra.mxu0 0.0
    %291 = vmatprep.subr.mxu0 0.0
    %292 = vmatpush1.msra.mxu0 0.0
    %293 = vmatprep.subr.mxu0 0.0
    %294 = vmatpush1.msra.mxu0 0.0
    %295 = vmatprep.subr.mxu0 0.0
    %296 = vmatpush1.msra.mxu0 0.0
    %297 = vmatprep.subr.mxu0 0.0
    %298 = vmatpush1.msra.mxu0 0.0
    %299 = vmatprep.subr.mxu0 0.0
    %300 = vmatpush1.msra.mxu0 0.0
    %301 = vmatprep.subr.mxu0 0.0
    %302 = vmatpush1.msra.mxu0 %v83
    %303 = vmatprep.subr.mxu0 0.0
    %304 = vmatpush1.msra.mxu0 %v82
    %305 = vmatprep.subr.mxu0 0.0
    %306 = vmatpush1.msra.mxu0 %v81
    %307 = vmatprep.subr.mxu0 0.0
    %308 = vmatpush1.msra.mxu0 %v80
    %309 = vmatprep.subr.mxu0 0.0
    %310 = vmatpush2.msra.mxu0 0.0
    %311 = vmatprep.subr.mxu0 0.0
    %312 = vmatpush2.msra.mxu0 0.0
    %313 = vmatprep.subr.mxu0 0.0
    %314 = vmatpush2.msra.mxu0 0.0
    %315 = vmatprep.subr.mxu0 0.0
    %316 = vmatpush2.msra.mxu0 0.0
    %317 = vmatprep.subr.mxu0 0.0
    %318 = vmatpush2.msra.mxu0 0.0
    %319 = vmatprep.subr.mxu0 0.0
    %320 = vmatpush2.msra.mxu0 0.0
    %321 = vmatprep.subr.mxu0 0.0
    %322 = vmatpush2.msra.mxu0 0.0
    %323 = vmatprep.subr.mxu0 0.0
    %324 = vmatpush2.msra.mxu0 0.0
    %325 = vmatprep.subr.mxu0 0.0
    %326 = vmatpush2.msra.mxu0 0.0
    %327 = vmatprep.subr.mxu0 0.0
    %328 = vmatpush2.msra.mxu0 0.0
    %329 = vmatprep.subr.mxu0 0.0
    %330 = vmatpush2.msra.mxu0 0.0
    %331 = vmatprep.subr.mxu0 0.0
    %332 = vmatpush2.msra.mxu0 0.0
    %333 = vmatprep.subr.mxu0 0.0
    %334 = vmatpush2.msra.mxu0 0.0
    %335 = vmatprep.subr.mxu0 0.0
    %336 = vmatpush2.msra.mxu0 0.0
    %337 = vmatprep.subr.mxu0 0.0
    %338 = vmatpush2.msra.mxu0 0.0
    %339 = vmatprep.subr.mxu0 0.0
    %340 = vmatpush2.msra.mxu0 0.0
    %341 = vmatprep.mubr.f32.mxu0 0.0
    %342 = vmatmul.mubr.f32.gmra.mxu0 %v275
    %v343 = vpop.f32.mrf.mxu0
    %v344 = vadd.f32 0.0, %v343
    %v345 = vpop.f32.mrf.mxu0
    %346 = vdwg.mxu0
    %v348 = vrot.slane %v344, 6
    %v350 = vadd.f32 %v165, %v348
    %v351 = vxor.u32 %v350, 2147483648
    %v352 = vmul.f32 %v351, 1.442695
    %v353 = vpow.pop %v352
    %v354 = vadd.f32 %v353, 1.0
    %v355 = vrcp.pop %v354
    %v356 = vmul.f32 1.0, %v355
    %v357 = vtanh.pop %v350
    %v359 = vrot.slane %v265, 6
    %v361 = vmul.f32 %v356, %v359
    %363 = vrot.lane.b32.xlu0 %v357, 64
    %v364 = vpop.permute.xlu0 %363
    %v366 = vmul.f32 %v356, %v364
    %368 = vrot.lane.b32.xlu0 %v366, 32
    %v369 = vpop.permute.xlu0 %368
    %v371 = vadd.f32 %v361, %v369
    %v372 = vtanh.pop %v371
    %374 = vrot.lane.b32.xlu0 %v372, 64
    %v375 = vpop.permute.xlu0 %374
    %v377 = vmul.f32 %v356, %v375
    %v379 = vrot.slane %v377, 2
    %380 = vrot.lane.b32.xlu0 %v379, 32
    %v381 = vpop.permute.xlu0 %380
    %v382 = vsel %vm173, %v381, 0
    %384 = vmatprep.subr.mxu0 0.0
    %385 = vmatpush1.msra.mxu0 0.0
    %386 = vmatprep.subr.mxu0 0.0
    %387 = vmatpush1.msra.mxu0 0.0
    %388 = vmatprep.subr.mxu0 0.0
    %389 = vmatpush1.msra.mxu0 0.0
    %390 = vmatprep.subr.mxu0 0.0
    %391 = vmatpush1.msra.mxu0 0.0
    %392 = vmatprep.subr.mxu0 0.0
    %393 = vmatpush1.msra.mxu0 0.0
    %394 = vmatprep.subr.mxu0 0.0
    %395 = vmatpush1.msra.mxu0 0.0
    %396 = vmatprep.subr.mxu0 0.0
    %397 = vmatpush1.msra.mxu0 0.0
    %398 = vmatprep.subr.mxu0 0.0
    %399 = vmatpush1.msra.mxu0 0.0
    %400 = vmatprep.subr.mxu0 0.0
    %401 = vmatpush1.msra.mxu0 0.0
    %402 = vmatprep.subr.mxu0 0.0
    %403 = vmatpush1.msra.mxu0 0.0
    %404 = vmatprep.subr.mxu0 0.0
    %405 = vmatpush1.msra.mxu0 0.0
    %406 = vmatprep.subr.mxu0 0.0
    %407 = vmatpush1.msra.mxu0 0.0
    %408 = vmatprep.subr.mxu0 0.0
    %409 = vmatpush1.msra.mxu0 %v83
    %410 = vmatprep.subr.mxu0 0.0
    %411 = vmatpush1.msra.mxu0 %v82
    %412 = vmatprep.subr.mxu0 0.0
    %413 = vmatpush1.msra.mxu0 %v81
    %414 = vmatprep.subr.mxu0 0.0
    %415 = vmatpush1.msra.mxu0 %v80
    %416 = vmatprep.subr.mxu0 0.0
    %417 = vmatpush2.msra.mxu0 0.0
    %418 = vmatprep.subr.mxu0 0.0
    %419 = vmatpush2.msra.mxu0 0.0
    %420 = vmatprep.subr.mxu0 0.0
    %421 = vmatpush2.msra.mxu0 0.0
    %422 = vmatprep.subr.mxu0 0.0
    %423 = vmatpush2.msra.mxu0 0.0
    %424 = vmatprep.subr.mxu0 0.0
    %425 = vmatpush2.msra.mxu0 0.0
    %426 = vmatprep.subr.mxu0 0.0
    %427 = vmatpush2.msra.mxu0 0.0
    %428 = vmatprep.subr.mxu0 0.0
    %429 = vmatpush2.msra.mxu0 0.0
    %430 = vmatprep.subr.mxu0 0.0
    %431 = vmatpush2.msra.mxu0 0.0
    %432 = vmatprep.subr.mxu0 0.0
    %433 = vmatpush2.msra.mxu0 0.0
    %434 = vmatprep.subr.mxu0 0.0
    %435 = vmatpush2.msra.mxu0 0.0
    %436 = vmatprep.subr.mxu0 0.0
    %437 = vmatpush2.msra.mxu0 0.0
    %438 = vmatprep.subr.mxu0 0.0
    %439 = vmatpush2.msra.mxu0 0.0
    %440 = vmatprep.subr.mxu0 0.0
    %441 = vmatpush2.msra.mxu0 0.0
    %442 = vmatprep.subr.mxu0 0.0
    %443 = vmatpush2.msra.mxu0 0.0
    %444 = vmatprep.subr.mxu0 0.0
    %445 = vmatpush2.msra.mxu0 0.0
    %446 = vmatprep.subr.mxu0 0.0
    %447 = vmatpush2.msra.mxu0 0.0
    %448 = vmatprep.mubr.f32.mxu0 0.0
    %449 = vmatmul.mubr.f32.gmra.mxu0 %v382
    %v450 = vpop.f32.mrf.mxu0
    %v451 = vadd.f32 0.0, %v450
    %v452 = vpop.f32.mrf.mxu0
    %453 = vdwg.mxu0
    %v455 = vrot.slane %v451, 4
    %v457 = vadd.f32 %v165, %v455
    %v458 = vxor.u32 %v457, 2147483648
    %v459 = vmul.f32 %v458, 1.442695
    %v460 = vpow.pop %v459
    %v461 = vadd.f32 %v460, 1.0
    %v462 = vrcp.pop %v461
    %v463 = vmul.f32 1.0, %v462
    %v464 = vtanh.pop %v457
    %v466 = vrot.slane %v371, 6
    %v468 = vmul.f32 %v463, %v466
    %470 = vrot.lane.b32.xlu0 %v464, 64
    %v471 = vpop.permute.xlu0 %470
    %v473 = vmul.f32 %v463, %v471
    %475 = vrot.lane.b32.xlu0 %v473, 32
    %v476 = vpop.permute.xlu0 %475
    %v478 = vadd.f32 %v468, %v476
    %v479 = vtanh.pop %v478
    %481 = vrot.lane.b32.xlu0 %v479, 64
    %v482 = vpop.permute.xlu0 %481
    %v484 = vmul.f32 %v463, %v482
    %v486 = vrot.slane %v484, 4
    %487 = vrot.lane.b32.xlu0 %v486, 32
    %v488 = vpop.permute.xlu0 %487
    %v489 = vsel %vm173, %v488, 0
    %491 = vmatprep.subr.mxu0 0.0
    %492 = vmatpush1.msra.mxu0 0.0
    %493 = vmatprep.subr.mxu0 0.0
    %494 = vmatpush1.msra.mxu0 0.0
    %495 = vmatprep.subr.mxu0 0.0
    %496 = vmatpush1.msra.mxu0 0.0
    %497 = vmatprep.subr.mxu0 0.0
    %498 = vmatpush1.msra.mxu0 0.0
    %499 = vmatprep.subr.mxu0 0.0
    %500 = vmatpush1.msra.mxu0 0.0
    %501 = vmatprep.subr.mxu0 0.0
    %502 = vmatpush1.msra.mxu0 0.0
    %503 = vmatprep.subr.mxu0 0.0
    %504 = vmatpush1.msra.mxu0 0.0
    %505 = vmatprep.subr.mxu0 0.0
    %506 = vmatpush1.msra.mxu0 0.0
    %507 = vmatprep.subr.mxu0 0.0
    %508 = vmatpush1.msra.mxu0 0.0
    %509 = vmatprep.subr.mxu0 0.0
    %510 = vmatpush1.msra.mxu0 0.0
    %511 = vmatprep.subr.mxu0 0.0
    %512 = vmatpush1.msra.mxu0 0.0
    %513 = vmatprep.subr.mxu0 0.0
    %514 = vmatpush1.msra.mxu0 0.0
    %515 = vmatprep.subr.mxu0 0.0
    %516 = vmatpush1.msra.mxu0 %v83
    %517 = vmatprep.subr.mxu0 0.0
    %518 = vmatpush1.msra.mxu0 %v82
    %519 = vmatprep.subr.mxu0 0.0
    %520 = vmatpush1.msra.mxu0 %v81
    %521 = vmatprep.subr.mxu0 0.0
    %522 = vmatpush1.msra.mxu0 %v80
    %523 = vmatprep.subr.mxu0 0.0
    %524 = vmatpush2.msra.mxu0 0.0
    %525 = vmatprep.subr.mxu0 0.0
    %526 = vmatpush2.msra.mxu0 0.0
    %527 = vmatprep.subr.mxu0 0.0
    %528 = vmatpush2.msra.mxu0 0.0
    %529 = vmatprep.subr.mxu0 0.0
    %530 = vmatpush2.msra.mxu0 0.0
    %531 = vmatprep.subr.mxu0 0.0
    %532 = vmatpush2.msra.mxu0 0.0
    %533 = vmatprep.subr.mxu0 0.0
    %534 = vmatpush2.msra.mxu0 0.0
    %535 = vmatprep.subr.mxu0 0.0
    %536 = vmatpush2.msra.mxu0 0.0
    %537 = vmatprep.subr.mxu0 0.0
    %538 = vmatpush2.msra.mxu0 0.0
    %539 = vmatprep.subr.mxu0 0.0
    %540 = vmatpush2.msra.mxu0 0.0
    %541 = vmatprep.subr.mxu0 0.0
    %542 = vmatpush2.msra.mxu0 0.0
    %543 = vmatprep.subr.mxu0 0.0
    %544 = vmatpush2.msra.mxu0 0.0
    %545 = vmatprep.subr.mxu0 0.0
    %546 = vmatpush2.msra.mxu0 0.0
    %547 = vmatprep.subr.mxu0 0.0
    %548 = vmatpush2.msra.mxu0 0.0
    %549 = vmatprep.subr.mxu0 0.0
    %550 = vmatpush2.msra.mxu0 0.0
    %551 = vmatprep.subr.mxu0 0.0
    %552 = vmatpush2.msra.mxu0 0.0
    %553 = vmatprep.subr.mxu0 0.0
    %554 = vmatpush2.msra.mxu0 0.0
    %555 = vmatprep.mubr.f32.mxu0 0.0
    %556 = vmatmul.mubr.f32.gmra.mxu0 %v489
    %v557 = vpop.f32.mrf.mxu0
    %v558 = vadd.f32 0.0, %v557
    %v559 = vpop.f32.mrf.mxu0
    %560 = vdwg.mxu0
    %v562 = vrot.slane %v558, 2
    %v564 = vadd.f32 %v165, %v562
    %v565 = vxor.u32 %v564, 2147483648
    %v566 = vmul.f32 %v565, 1.442695
    %v567 = vpow.pop %v566
    %v568 = vadd.f32 %v567, 1.0
    %v569 = vrcp.pop %v568
    %v570 = vmul.f32 1.0, %v569
    %v571 = vtanh.pop %v564
    %v573 = vrot.slane %v478, 6
    %v575 = vmul.f32 %v570, %v573
    %577 = vrot.lane.b32.xlu0 %v571, 64
    %v578 = vpop.permute.xlu0 %577
    %v580 = vmul.f32 %v570, %v578
    %582 = vrot.lane.b32.xlu0 %v580, 32
    %v583 = vpop.permute.xlu0 %582
    %v585 = vadd.f32 %v575, %v583
    %v586 = vtanh.pop %v585
    %588 = vrot.lane.b32.xlu0 %v586, 64
    %v589 = vpop.permute.xlu0 %588
    %v591 = vmul.f32 %v570, %v589
    %v593 = vrot.slane %v591, 6
    %594 = vrot.lane.b32.xlu0 %v593, 32
    %v595 = vpop.permute.xlu0 %594
    %v596 = vsel %vm173, %v595, 0
    %598 = vmatprep.subr.mxu0 0.0
    %599 = vmatpush1.msra.mxu0 0.0
    %600 = vmatprep.subr.mxu0 0.0
    %601 = vmatpush1.msra.mxu0 0.0
    %602 = vmatprep.subr.mxu0 0.0
    %603 = vmatpush1.msra.mxu0 0.0
    %604 = vmatprep.subr.mxu0 0.0
    %605 = vmatpush1.msra.mxu0 0.0
    %606 = vmatprep.subr.mxu0 0.0
    %607 = vmatpush1.msra.mxu0 0.0
    %608 = vmatprep.subr.mxu0 0.0
    %609 = vmatpush1.msra.mxu0 0.0
    %610 = vmatprep.subr.mxu0 0.0
    %611 = vmatpush1.msra.mxu0 0.0
    %612 = vmatprep.subr.mxu0 0.0
    %613 = vmatpush1.msra.mxu0 0.0
    %614 = vmatprep.subr.mxu0 0.0
    %615 = vmatpush1.msra.mxu0 0.0
    %616 = vmatprep.subr.mxu0 0.0
    %617 = vmatpush1.msra.mxu0 0.0
    %618 = vmatprep.subr.mxu0 0.0
    %619 = vmatpush1.msra.mxu0 0.0
    %620 = vmatprep.subr.mxu0 0.0
    %621 = vmatpush1.msra.mxu0 0.0
    %622 = vmatprep.subr.mxu0 0.0
    %623 = vmatpush1.msra.mxu0 %v83
    %624 = vmatprep.subr.mxu0 0.0
    %625 = vmatpush1.msra.mxu0 %v82
    %626 = vmatprep.subr.mxu0 0.0
    %627 = vmatpush1.msra.mxu0 %v81
    %628 = vmatprep.subr.mxu0 0.0
    %629 = vmatpush1.msra.mxu0 %v80
    %630 = vmatprep.subr.mxu0 0.0
    %631 = vmatpush2.msra.mxu0 0.0
    %632 = vmatprep.subr.mxu0 0.0
    %633 = vmatpush2.msra.mxu0 0.0
    %634 = vmatprep.subr.mxu0 0.0
    %635 = vmatpush2.msra.mxu0 0.0
    %636 = vmatprep.subr.mxu0 0.0
    %637 = vmatpush2.msra.mxu0 0.0
    %638 = vmatprep.subr.mxu0 0.0
    %639 = vmatpush2.msra.mxu0 0.0
    %640 = vmatprep.subr.mxu0 0.0
    %641 = vmatpush2.msra.mxu0 0.0
    %642 = vmatprep.subr.mxu0 0.0
    %643 = vmatpush2.msra.mxu0 0.0
    %644 = vmatprep.subr.mxu0 0.0
    %645 = vmatpush2.msra.mxu0 0.0
    %646 = vmatprep.subr.mxu0 0.0
    %647 = vmatpush2.msra.mxu0 0.0
    %648 = vmatprep.subr.mxu0 0.0
    %649 = vmatpush2.msra.mxu0 0.0
    %650 = vmatprep.subr.mxu0 0.0
    %651 = vmatpush2.msra.mxu0 0.0
    %652 = vmatprep.subr.mxu0 0.0
    %653 = vmatpush2.msra.mxu0 0.0
    %654 = vmatprep.subr.mxu0 0.0
    %655 = vmatpush2.msra.mxu0 0.0
    %656 = vmatprep.subr.mxu0 0.0
    %657 = vmatpush2.msra.mxu0 0.0
    %658 = vmatprep.subr.mxu0 0.0
    %659 = vmatpush2.msra.mxu0 0.0
    %660 = vmatprep.subr.mxu0 0.0
    %661 = vmatpush2.msra.mxu0 0.0
    %662 = vmatprep.mubr.f32.mxu0 0.0
    %663 = vmatmul.mubr.f32.gmra.mxu0 %v596
    %v664 = vpop.f32.mrf.mxu0
    %v665 = vadd.f32 0.0, %v664
    %v666 = vpop.f32.mrf.mxu0
    %667 = vdwg.mxu0
    %v668 = vadd.f32 %v170, %v665
    %v669 = vxor.u32 %v668, 2147483648
    %v670 = vmul.f32 %v669, 1.442695
    %v671 = vpow.pop %v670
    %v672 = vadd.f32 %v671, 1.0
    %v673 = vrcp.pop %v672
    %v674 = vmul.f32 1.0, %v673
    %v675 = vtanh.pop %v668
    %v677 = vrot.slane %v585, 6
    %v679 = vmul.f32 %v674, %v677
    %681 = vrot.lane.b32.xlu0 %v675, 64
    %v682 = vpop.permute.xlu0 %681
    %v684 = vmul.f32 %v674, %v682
    %686 = vrot.lane.b32.xlu0 %v684, 32
    %v687 = vpop.permute.xlu0 %686
    %v689 = vadd.f32 %v679, %v687
    %v690 = vtanh.pop %v689
    %692 = vrot.lane.b32.xlu0 %v690, 64
    %v693 = vpop.permute.xlu0 %692
    %v695 = vmul.f32 %v674, %v693
    %697 = vrot.lane.b32.xlu0 %v695, 32
    %v698 = vpop.permute.xlu0 %697
    %v699 = vsel %vm173, %v698, 0
    %701 = vmatprep.subr.mxu0 0.0
    %702 = vmatpush1.msra.mxu0 0.0
    %703 = vmatprep.subr.mxu0 0.0
    %704 = vmatpush1.msra.mxu0 0.0
    %705 = vmatprep.subr.mxu0 0.0
    %706 = vmatpush1.msra.mxu0 0.0
    %707 = vmatprep.subr.mxu0 0.0
    %708 = vmatpush1.msra.mxu0 0.0
    %709 = vmatprep.subr.mxu0 0.0
    %710 = vmatpush1.msra.mxu0 0.0
    %711 = vmatprep.subr.mxu0 0.0
    %712 = vmatpush1.msra.mxu0 0.0
    %713 = vmatprep.subr.mxu0 0.0
    %714 = vmatpush1.msra.mxu0 0.0
    %715 = vmatprep.subr.mxu0 0.0
    %716 = vmatpush1.msra.mxu0 0.0
    %717 = vmatprep.subr.mxu0 0.0
    %718 = vmatpush1.msra.mxu0 0.0
    %719 = vmatprep.subr.mxu0 0.0
    %720 = vmatpush1.msra.mxu0 0.0
    %721 = vmatprep.subr.mxu0 0.0
    %722 = vmatpush1.msra.mxu0 0.0
    %723 = vmatprep.subr.mxu0 0.0
    %724 = vmatpush1.msra.mxu0 0.0
    %725 = vmatprep.subr.mxu0 0.0
    %726 = vmatpush1.msra.mxu0 %v83
    %727 = vmatprep.subr.mxu0 0.0
    %728 = vmatpush1.msra.mxu0 %v82
    %729 = vmatprep.subr.mxu0 0.0
    %730 = vmatpush1.msra.mxu0 %v81
    %731 = vmatprep.subr.mxu0 0.0
    %732 = vmatpush1.msra.mxu0 %v80
    %733 = vmatprep.subr.mxu0 0.0
    %734 = vmatpush2.msra.mxu0 0.0
    %735 = vmatprep.subr.mxu0 0.0
    %736 = vmatpush2.msra.mxu0 0.0
    %737 = vmatprep.subr.mxu0 0.0
    %738 = vmatpush2.msra.mxu0 0.0
    %739 = vmatprep.subr.mxu0 0.0
    %740 = vmatpush2.msra.mxu0 0.0
    %741 = vmatprep.subr.mxu0 0.0
    %742 = vmatpush2.msra.mxu0 0.0
    %743 = vmatprep.subr.mxu0 0.0
    %744 = vmatpush2.msra.mxu0 0.0
    %745 = vmatprep.subr.mxu0 0.0
    %746 = vmatpush2.msra.mxu0 0.0
    %747 = vmatprep.subr.mxu0 0.0
    %748 = vmatpush2.msra.mxu0 0.0
    %749 = vmatprep.subr.mxu0 0.0
    %750 = vmatpush2.msra.mxu0 0.0
    %751 = vmatprep.subr.mxu0 0.0
    %752 = vmatpush2.msra.mxu0 0.0
    %753 = vmatprep.subr.mxu0 0.0
    %754 = vmatpush2.msra.mxu0 0.0
    %755 = vmatprep.subr.mxu0 0.0
    %756 = vmatpush2.msra.mxu0 0.0
    %757 = vmatprep.subr.mxu0 0.0
    %758 = vmatpush2.msra.mxu0 0.0
    %759 = vmatprep.subr.mxu0 0.0
    %760 = vmatpush2.msra.mxu0 0.0
    %761 = vmatprep.subr.mxu0 0.0
    %762 = vmatpush2.msra.mxu0 0.0
    %763 = vmatprep.subr.mxu0 0.0
    %764 = vmatpush2.msra.mxu0 0.0
    %765 = vmatprep.mubr.f32.mxu0 0.0
    %766 = vmatmul.mubr.f32.gmra.mxu0 %v699
    %v767 = vpop.f32.mrf.mxu0
    %v768 = vadd.f32 0.0, %v767
    %v769 = vpop.f32.mrf.mxu0
    %770 = vdwg.mxu0
    %v772 = vrot.slane %v768, 6
    %v774 = vadd.f32 %v170, %v772
    %v775 = vxor.u32 %v774, 2147483648
    %v776 = vmul.f32 %v775, 1.442695
    %v777 = vpow.pop %v776
    %v778 = vadd.f32 %v777, 1.0
    %v779 = vrcp.pop %v778
    %v780 = vmul.f32 1.0, %v779
    %v781 = vtanh.pop %v774
    %v783 = vrot.slane %v689, 6
    %v785 = vmul.f32 %v780, %v783
    %787 = vrot.lane.b32.xlu0 %v781, 64
    %v788 = vpop.permute.xlu0 %787
    %v790 = vmul.f32 %v780, %v788
    %792 = vrot.lane.b32.xlu0 %v790, 32
    %v793 = vpop.permute.xlu0 %792
    %v795 = vadd.f32 %v785, %v793
    %v796 = vtanh.pop %v795
    %798 = vrot.lane.b32.xlu0 %v796, 64
    %v799 = vpop.permute.xlu0 %798
    %v801 = vmul.f32 %v780, %v799
    %v803 = vrot.slane %v801, 2
    %804 = vrot.lane.b32.xlu0 %v803, 32
    %v805 = vpop.permute.xlu0 %804
    %v806 = vsel %vm173, %v805, 0
    %808 = vmatprep.subr.mxu0 0.0
    %809 = vmatpush1.msra.mxu0 0.0
    %810 = vmatprep.subr.mxu0 0.0
    %811 = vmatpush1.msra.mxu0 0.0
    %812 = vmatprep.subr.mxu0 0.0
    %813 = vmatpush1.msra.mxu0 0.0
    %814 = vmatprep.subr.mxu0 0.0
    %815 = vmatpush1.msra.mxu0 0.0
    %816 = vmatprep.subr.mxu0 0.0
    %817 = vmatpush1.msra.mxu0 0.0
    %818 = vmatprep.subr.mxu0 0.0
    %819 = vmatpush1.msra.mxu0 0.0
    %820 = vmatprep.subr.mxu0 0.0
    %821 = vmatpush1.msra.mxu0 0.0
    %822 = vmatprep.subr.mxu0 0.0
    %823 = vmatpush1.msra.mxu0 0.0
    %824 = vmatprep.subr.mxu0 0.0
    %825 = vmatpush1.msra.mxu0 0.0
    %826 = vmatprep.subr.mxu0 0.0
    %827 = vmatpush1.msra.mxu0 0.0
    %828 = vmatprep.subr.mxu0 0.0
    %829 = vmatpush1.msra.mxu0 0.0
    %830 = vmatprep.subr.mxu0 0.0
    %831 = vmatpush1.msra.mxu0 0.0
    %832 = vmatprep.subr.mxu0 0.0
    %833 = vmatpush1.msra.mxu0 %v83
    %834 = vmatprep.subr.mxu0 0.0
    %835 = vmatpush1.msra.mxu0 %v82
    %836 = vmatprep.subr.mxu0 0.0
    %837 = vmatpush1.msra.mxu0 %v81
    %838 = vmatprep.subr.mxu0 0.0
    %839 = vmatpush1.msra.mxu0 %v80
    %840 = vmatprep.subr.mxu0 0.0
    %841 = vmatpush2.msra.mxu0 0.0
    %842 = vmatprep.subr.mxu0 0.0
    %843 = vmatpush2.msra.mxu0 0.0
    %844 = vmatprep.subr.mxu0 0.0
    %845 = vmatpush2.msra.mxu0 0.0
    %846 = vmatprep.subr.mxu0 0.0
    %847 = vmatpush2.msra.mxu0 0.0
    %848 = vmatprep.subr.mxu0 0.0
    %849 = vmatpush2.msra.mxu0 0.0
    %850 = vmatprep.subr.mxu0 0.0
    %851 = vmatpush2.msra.mxu0 0.0
    %852 = vmatprep.subr.mxu0 0.0
    %853 = vmatpush2.msra.mxu0 0.0
    %854 = vmatprep.subr.mxu0 0.0
    %855 = vmatpush2.msra.mxu0 0.0
    %856 = vmatprep.subr.mxu0 0.0
    %857 = vmatpush2.msra.mxu0 0.0
    %858 = vmatprep.subr.mxu0 0.0
    %859 = vmatpush2.msra.mxu0 0.0
    %860 = vmatprep.subr.mxu0 0.0
    %861 = vmatpush2.msra.mxu0 0.0
    %862 = vmatprep.subr.mxu0 0.0
    %863 = vmatpush2.msra.mxu0 0.0
    %864 = vmatprep.subr.mxu0 0.0
    %865 = vmatpush2.msra.mxu0 0.0
    %866 = vmatprep.subr.mxu0 0.0
    %867 = vmatpush2.msra.mxu0 0.0
    %868 = vmatprep.subr.mxu0 0.0
    %869 = vmatpush2.msra.mxu0 0.0
    %870 = vmatprep.subr.mxu0 0.0
    %871 = vmatpush2.msra.mxu0 0.0
    %872 = vmatprep.mubr.f32.mxu0 0.0
    %873 = vmatmul.mubr.f32.gmra.mxu0 %v806
    %v874 = vpop.f32.mrf.mxu0
    %v875 = vadd.f32 0.0, %v874
    %v876 = vpop.f32.mrf.mxu0
    %877 = vdwg.mxu0
    %v879 = vrot.slane %v875, 4
    %v881 = vadd.f32 %v170, %v879
    %v882 = vxor.u32 %v881, 2147483648
    %v883 = vmul.f32 %v882, 1.442695
    %v884 = vpow.pop %v883
    %v885 = vadd.f32 %v884, 1.0
    %v886 = vrcp.pop %v885
    %v887 = vmul.f32 1.0, %v886
    %v888 = vtanh.pop %v881
    %v890 = vrot.slane %v795, 6
    %v892 = vmul.f32 %v887, %v890
    %894 = vrot.lane.b32.xlu0 %v888, 64
    %v895 = vpop.permute.xlu0 %894
    %v897 = vmul.f32 %v887, %v895
    %899 = vrot.lane.b32.xlu0 %v897, 32
    %v900 = vpop.permute.xlu0 %899
    %v902 = vadd.f32 %v892, %v900
    %v903 = vtanh.pop %v902
    %905 = vrot.lane.b32.xlu0 %v903, 64
    %v906 = vpop.permute.xlu0 %905
    %v908 = vmul.f32 %v887, %v906
    %v910 = vrot.slane %v908, 4
    %911 = vrot.lane.b32.xlu0 %v910, 32
    %v912 = vpop.permute.xlu0 %911
    %v913 = vsel %vm173, %v912, 0
    %915 = vmatprep.subr.mxu0 0.0
    %916 = vmatpush1.msra.mxu0 0.0
    %917 = vmatprep.subr.mxu0 0.0
    %918 = vmatpush1.msra.mxu0 0.0
    %919 = vmatprep.subr.mxu0 0.0
    %920 = vmatpush1.msra.mxu0 0.0
    %921 = vmatprep.subr.mxu0 0.0
    %922 = vmatpush1.msra.mxu0 0.0
    %923 = vmatprep.subr.mxu0 0.0
    %924 = vmatpush1.msra.mxu0 0.0
    %925 = vmatprep.subr.mxu0 0.0
    %926 = vmatpush1.msra.mxu0 0.0
    %927 = vmatprep.subr.mxu0 0.0
    %928 = vmatpush1.msra.mxu0 0.0
    %929 = vmatprep.subr.mxu0 0.0
    %930 = vmatpush1.msra.mxu0 0.0
    %931 = vmatprep.subr.mxu0 0.0
    %932 = vmatpush1.msra.mxu0 0.0
    %933 = vmatprep.subr.mxu0 0.0
    %934 = vmatpush1.msra.mxu0 0.0
    %935 = vmatprep.subr.mxu0 0.0
    %936 = vmatpush1.msra.mxu0 0.0
    %937 = vmatprep.subr.mxu0 0.0
    %938 = vmatpush1.msra.mxu0 0.0
    %939 = vmatprep.subr.mxu0 0.0
    %940 = vmatpush1.msra.mxu0 %v83
    %941 = vmatprep.subr.mxu0 0.0
    %942 = vmatpush1.msra.mxu0 %v82
    %943 = vmatprep.subr.mxu0 0.0
    %944 = vmatpush1.msra.mxu0 %v81
    %945 = vmatprep.subr.mxu0 0.0
    %946 = vmatpush1.msra.mxu0 %v80
    %947 = vmatprep.subr.mxu0 0.0
    %948 = vmatpush2.msra.mxu0 0.0
    %949 = vmatprep.subr.mxu0 0.0
    %950 = vmatpush2.msra.mxu0 0.0
    %951 = vmatprep.subr.mxu0 0.0
    %952 = vmatpush2.msra.mxu0 0.0
    %953 = vmatprep.subr.mxu0 0.0
    %954 = vmatpush2.msra.mxu0 0.0
    %955 = vmatprep.subr.mxu0 0.0
    %956 = vmatpush2.msra.mxu0 0.0
    %957 = vmatprep.subr.mxu0 0.0
    %958 = vmatpush2.msra.mxu0 0.0
    %959 = vmatprep.subr.mxu0 0.0
    %960 = vmatpush2.msra.mxu0 0.0
    %961 = vmatprep.subr.mxu0 0.0
    %962 = vmatpush2.msra.mxu0 0.0
    %963 = vmatprep.subr.mxu0 0.0
    %964 = vmatpush2.msra.mxu0 0.0
    %965 = vmatprep.subr.mxu0 0.0
    %966 = vmatpush2.msra.mxu0 0.0
    %967 = vmatprep.subr.mxu0 0.0
    %968 = vmatpush2.msra.mxu0 0.0
    %969 = vmatprep.subr.mxu0 0.0
    %970 = vmatpush2.msra.mxu0 0.0
    %971 = vmatprep.subr.mxu0 0.0
    %972 = vmatpush2.msra.mxu0 0.0
    %973 = vmatprep.subr.mxu0 0.0
    %974 = vmatpush2.msra.mxu0 0.0
    %975 = vmatprep.subr.mxu0 0.0
    %976 = vmatpush2.msra.mxu0 0.0
    %977 = vmatprep.subr.mxu0 0.0
    %978 = vmatpush2.msra.mxu0 0.0
    %979 = vmatprep.mubr.f32.mxu0 0.0
    %980 = vmatmul.mubr.f32.gmra.mxu0 %v913
    %v981 = vpop.f32.mrf.mxu0
    %v982 = vadd.f32 0.0, %v981
    %v983 = vpop.f32.mrf.mxu0
    %984 = vdwg.mxu0
    %v986 = vrot.slane %v982, 2
    %v988 = vadd.f32 %v170, %v986
    %v989 = vxor.u32 %v988, 2147483648
    %v990 = vmul.f32 %v989, 1.442695
    %v991 = vpow.pop %v990
    %v992 = vadd.f32 %v991, 1.0
    %v993 = vrcp.pop %v992
    %v994 = vmul.f32 1.0, %v993
    %v995 = vtanh.pop %v988
    %v997 = vrot.slane %v902, 6
    %v999 = vmul.f32 %v994, %v997
    %1001 = vrot.lane.b32.xlu0 %v995, 64
    %v1002 = vpop.permute.xlu0 %1001
    %v1004 = vmul.f32 %v994, %v1002
    %1006 = vrot.lane.b32.xlu0 %v1004, 32
    %v1007 = vpop.permute.xlu0 %1006
    %v1009 = vadd.f32 %v999, %v1007
    %v1010 = vtanh.pop %v1009
    %1012 = vrot.lane.b32.xlu0 %v1010, 64
    %v1013 = vpop.permute.xlu0 %1012
    %v1015 = vmul.f32 %v994, %v1013
    %vm1016 = vcmask 1041408
    %v1017 = vsel %vm1016, %v271, %v377
    %vm1018 = vcmask 1043456
    %v1019 = vsel %vm1018, %v1017, %v484
    %vm1020 = vcmask 1045504
    %v1021 = vsel %vm1020, %v1019, %v591
    %v1022 = vsel %vm1016, %v695, %v801
    %v1023 = vsel %vm1018, %v1022, %v908
    %v1024 = vsel %vm1020, %v1023, %v1015
    %1026 = vrot.lane.b32.xlu0 %v1015, 32
    %v1027 = vpop.permute.xlu0 %1026
    %vm1029 = vcmask 261126
    %1030 = vst.msk [vmem:[#allocation9 - $0x6] sm:$0xc0] %vm1029, %v1027
    %1032 = vrot.lane.b32.xlu0 %v1009, 96
    %v1033 = vpop.permute.xlu0 %1032
    %1035 = vst.msk [vmem:[#allocation11 - $0x6] sm:$0xc0] %vm1029, %v1033
    %v1036 = vld [vmem:[%s4] sm:$0xff]
    %v1037 = vld [vmem:[%s4 + $0x8] sm:$0xff]
    %v1038 = vld [vmem:[%s4 + $0x10] sm:$0xff]
    %v1039 = vld [vmem:[%s4 + $0x18] sm:$0xff]
    %v1040 = vld [vmem:[#allocation5] sm:$0xff]
    %v1041 = vld [vmem:[#allocation5 + $0x8] sm:$0xff]
    %v1042 = vld [vmem:[#allocation5 + $0x10] sm:$0xff]
    %v1043 = vld [vmem:[#allocation5 + $0x18] sm:$0xff]
    %v1044 = vld [vmem:[%s6] sm:$0x1]
    %v1046 = vlaneseq
    %v1047 = vshrl.u32 %v1046, 7
    %v1048 = vsub.s32 0, %v1047
    %v1049 = vrot.slane %v1044, %v1048
    %1053 = vrot.lane.b32.xlu0 %v1021, 32
    %v1054 = vpop.permute.xlu0 %1053
    %1055 = vrot.lane.b32.xlu0 %v1024, 32
    %v1056 = vpop.permute.xlu0 %1055
    %v1057 = vsel %vm173, %v1054, 0
    %v1059 = vsel %vm173, %v1056, 0
    %1061 = vmatprep.subr.mxu0 0.0
    %1062 = vmatpush1.msra.mxu0 0.0
    %1063 = vmatprep.subr.mxu0 0.0
    %1064 = vmatpush1.msra.mxu0 0.0
    %1065 = vmatprep.subr.mxu0 0.0
    %1066 = vmatpush1.msra.mxu0 0.0
    %1067 = vmatprep.subr.mxu0 0.0
    %1068 = vmatpush1.msra.mxu0 0.0
    %1069 = vmatprep.subr.mxu0 0.0
    %1070 = vmatpush1.msra.mxu0 0.0
    %1071 = vmatprep.subr.mxu0 0.0
    %1072 = vmatpush1.msra.mxu0 0.0
    %1073 = vmatprep.subr.mxu0 0.0
    %1074 = vmatpush1.msra.mxu0 0.0
    %1075 = vmatprep.subr.mxu0 0.0
    %1076 = vmatpush1.msra.mxu0 0.0
    %1077 = vmatprep.subr.mxu0 0.0
    %1078 = vmatpush1.msra.mxu0 0.0
    %1079 = vmatprep.subr.mxu0 0.0
    %1080 = vmatpush1.msra.mxu0 0.0
    %1081 = vmatprep.subr.mxu0 0.0
    %1082 = vmatpush1.msra.mxu0 0.0
    %1083 = vmatprep.subr.mxu0 0.0
    %1084 = vmatpush1.msra.mxu0 0.0
    %1085 = vmatprep.subr.mxu0 0.0
    %1086 = vmatpush1.msra.mxu0 %v1039
    %1087 = vmatprep.subr.mxu0 0.0
    %1088 = vmatpush1.msra.mxu0 %v1038
    %1089 = vmatprep.subr.mxu0 0.0
    %1090 = vmatpush1.msra.mxu0 %v1037
    %1091 = vmatprep.subr.mxu0 0.0
    %1092 = vmatpush1.msra.mxu0 %v1036
    %1093 = vmatprep.subr.mxu0 0.0
    %1094 = vmatpush2.msra.mxu0 0.0
    %1095 = vmatprep.subr.mxu0 0.0
    %1096 = vmatpush2.msra.mxu0 0.0
    %1097 = vmatprep.subr.mxu0 0.0
    %1098 = vmatpush2.msra.mxu0 0.0
    %1099 = vmatprep.subr.mxu0 0.0
    %1100 = vmatpush2.msra.mxu0 0.0
    %1101 = vmatprep.subr.mxu0 0.0
    %1102 = vmatpush2.msra.mxu0 0.0
    %1103 = vmatprep.subr.mxu0 0.0
    %1104 = vmatpush2.msra.mxu0 0.0
    %1105 = vmatprep.subr.mxu0 0.0
    %1106 = vmatpush2.msra.mxu0 0.0
    %1107 = vmatprep.subr.mxu0 0.0
    %1108 = vmatpush2.msra.mxu0 0.0
    %1109 = vmatprep.subr.mxu0 0.0
    %1110 = vmatpush2.msra.mxu0 0.0
    %1111 = vmatprep.subr.mxu0 0.0
    %1112 = vmatpush2.msra.mxu0 0.0
    %1113 = vmatprep.subr.mxu0 0.0
    %1114 = vmatpush2.msra.mxu0 0.0
    %1115 = vmatprep.subr.mxu0 0.0
    %1116 = vmatpush2.msra.mxu0 0.0
    %1117 = vmatprep.subr.mxu0 0.0
    %1118 = vmatpush2.msra.mxu0 0.0
    %1119 = vmatprep.subr.mxu0 0.0
    %1120 = vmatpush2.msra.mxu0 0.0
    %1121 = vmatprep.subr.mxu0 0.0
    %1122 = vmatpush2.msra.mxu0 0.0
    %1123 = vmatprep.subr.mxu0 0.0
    %1124 = vmatpush2.msra.mxu0 0.0
    %1125 = vmatprep.mubr.f32.mxu0 0.0
    %1126 = vmatmul.mubr.f32.gmra.mxu0 %v1057
    %v1127 = vpop.f32.mrf.mxu0
    %v1128 = vadd.f32 %v1049, %v1127
    %v1129 = vpop.f32.mrf.mxu0
    %1130 = vmatprep.mubr.f32.mxu0 0.0
    %1131 = vmatmul.mubr.f32.gmra.mxu0 %v1059
    %v1132 = vpop.f32.mrf.mxu0
    %v1133 = vadd.f32 %v1049, %v1132
    %v1134 = vpop.f32.mrf.mxu0
    %1135 = vdwg.mxu0
    %1136 = vmatprep.subr.mxu0 0.0
    %1137 = vmatpush1.msra.mxu0 0.0
    %1138 = vmatprep.subr.mxu0 0.0
    %1139 = vmatpush1.msra.mxu0 0.0
    %1140 = vmatprep.subr.mxu0 0.0
    %1141 = vmatpush1.msra.mxu0 0.0
    %1142 = vmatprep.subr.mxu0 0.0
    %1143 = vmatpush1.msra.mxu0 0.0
    %1144 = vmatprep.subr.mxu0 0.0
    %1145 = vmatpush1.msra.mxu0 0.0
    %1146 = vmatprep.subr.mxu0 0.0
    %1147 = vmatpush1.msra.mxu0 0.0
    %1148 = vmatprep.subr.mxu0 0.0
    %1149 = vmatpush1.msra.mxu0 0.0
    %1150 = vmatprep.subr.mxu0 0.0
    %1151 = vmatpush1.msra.mxu0 0.0
    %1152 = vmatprep.subr.mxu0 0.0
    %1153 = vmatpush1.msra.mxu0 0.0
    %1154 = vmatprep.subr.mxu0 0.0
    %1155 = vmatpush1.msra.mxu0 0.0
    %1156 = vmatprep.subr.mxu0 0.0
    %1157 = vmatpush1.msra.mxu0 0.0
    %1158 = vmatprep.subr.mxu0 0.0
    %1159 = vmatpush1.msra.mxu0 0.0
    %1160 = vmatprep.subr.mxu0 0.0
    %1161 = vmatpush1.msra.mxu0 %v1043
    %1162 = vmatprep.subr.mxu0 0.0
    %1163 = vmatpush1.msra.mxu0 %v1042
    %1164 = vmatprep.subr.mxu0 0.0
    %1165 = vmatpush1.msra.mxu0 %v1041
    %1166 = vmatprep.subr.mxu0 0.0
    %1167 = vmatpush1.msra.mxu0 %v1040
    %1168 = vmatprep.subr.mxu0 0.0
    %1169 = vmatpush2.msra.mxu0 0.0
    %1170 = vmatprep.subr.mxu0 0.0
    %1171 = vmatpush2.msra.mxu0 0.0
    %1172 = vmatprep.subr.mxu0 0.0
    %1173 = vmatpush2.msra.mxu0 0.0
    %1174 = vmatprep.subr.mxu0 0.0
    %1175 = vmatpush2.msra.mxu0 0.0
    %1176 = vmatprep.subr.mxu0 0.0
    %1177 = vmatpush2.msra.mxu0 0.0
    %1178 = vmatprep.subr.mxu0 0.0
    %1179 = vmatpush2.msra.mxu0 0.0
    %1180 = vmatprep.subr.mxu0 0.0
    %1181 = vmatpush2.msra.mxu0 0.0
    %1182 = vmatprep.subr.mxu0 0.0
    %1183 = vmatpush2.msra.mxu0 0.0
    %1184 = vmatprep.subr.mxu0 0.0
    %1185 = vmatpush2.msra.mxu0 0.0
    %1186 = vmatprep.subr.mxu0 0.0
    %1187 = vmatpush2.msra.mxu0 0.0
    %1188 = vmatprep.subr.mxu0 0.0
    %1189 = vmatpush2.msra.mxu0 0.0
    %1190 = vmatprep.subr.mxu0 0.0
    %1191 = vmatpush2.msra.mxu0 0.0
    %1192 = vmatprep.subr.mxu0 0.0
    %1193 = vmatpush2.msra.mxu0 0.0
    %1194 = vmatprep.subr.mxu0 0.0
    %1195 = vmatpush2.msra.mxu0 0.0
    %1196 = vmatprep.subr.mxu0 0.0
    %1197 = vmatpush2.msra.mxu0 0.0
    %1198 = vmatprep.subr.mxu0 0.0
    %1199 = vmatpush2.msra.mxu0 0.0
    %1200 = vmatprep.mubr.f32.mxu0 0.0
    %1201 = vmatmul.mubr.f32.gmra.mxu0 %v175
    %v1202 = vpop.f32.mrf.mxu0
    %v1203 = vadd.f32 0.0, %v1202
    %v1204 = vpop.f32.mrf.mxu0
    %1205 = vdwg.mxu0
    %v1206 = vadd.f32 %v1128, %v1203
    %v1207 = vxor.u32 %v1206, 2147483648
    %v1208 = vmul.f32 %v1207, 1.442695
    %v1209 = vpow.pop %v1208
    %v1210 = vadd.f32 %v1209, 1.0
    %v1211 = vrcp.pop %v1210
    %v1212 = vmul.f32 1.0, %v1211
    %v1213 = vtanh.pop %v1206
    %v1214 = vmul.f32 %v1212, 0.0
    %1216 = vrot.lane.b32.xlu0 %v1213, 64
    %v1217 = vpop.permute.xlu0 %1216
    %v1219 = vmul.f32 %v1212, %v1217
    %1221 = vrot.lane.b32.xlu0 %v1219, 32
    %v1222 = vpop.permute.xlu0 %1221
    %v1224 = vadd.f32 %v1214, %v1222
    %v1225 = vtanh.pop %v1224
    %1227 = vrot.lane.b32.xlu0 %v1225, 64
    %v1228 = vpop.permute.xlu0 %1227
    %v1230 = vmul.f32 %v1212, %v1228
    %1232 = vrot.lane.b32.xlu0 %v1230, 32
    %v1233 = vpop.permute.xlu0 %1232
    %v1234 = vsel %vm173, %v1233, 0
    %1236 = vmatprep.subr.mxu0 0.0
    %1237 = vmatpush1.msra.mxu0 0.0
    %1238 = vmatprep.subr.mxu0 0.0
    %1239 = vmatpush1.msra.mxu0 0.0
    %1240 = vmatprep.subr.mxu0 0.0
    %1241 = vmatpush1.msra.mxu0 0.0
    %1242 = vmatprep.subr.mxu0 0.0
    %1243 = vmatpush1.msra.mxu0 0.0
    %1244 = vmatprep.subr.mxu0 0.0
    %1245 = vmatpush1.msra.mxu0 0.0
    %1246 = vmatprep.subr.mxu0 0.0
    %1247 = vmatpush1.msra.mxu0 0.0
    %1248 = vmatprep.subr.mxu0 0.0
    %1249 = vmatpush1.msra.mxu0 0.0
    %1250 = vmatprep.subr.mxu0 0.0
    %1251 = vmatpush1.msra.mxu0 0.0
    %1252 = vmatprep.subr.mxu0 0.0
    %1253 = vmatpush1.msra.mxu0 0.0
    %1254 = vmatprep.subr.mxu0 0.0
    %1255 = vmatpush1.msra.mxu0 0.0
    %1256 = vmatprep.subr.mxu0 0.0
    %1257 = vmatpush1.msra.mxu0 0.0
    %1258 = vmatprep.subr.mxu0 0.0
    %1259 = vmatpush1.msra.mxu0 0.0
    %1260 = vmatprep.subr.mxu0 0.0
    %1261 = vmatpush1.msra.mxu0 %v1043
    %1262 = vmatprep.subr.mxu0 0.0
    %1263 = vmatpush1.msra.mxu0 %v1042
    %1264 = vmatprep.subr.mxu0 0.0
    %1265 = vmatpush1.msra.mxu0 %v1041
    %1266 = vmatprep.subr.mxu0 0.0
    %1267 = vmatpush1.msra.mxu0 %v1040
    %1268 = vmatprep.subr.mxu0 0.0
    %1269 = vmatpush2.msra.mxu0 0.0
    %1270 = vmatprep.subr.mxu0 0.0
    %1271 = vmatpush2.msra.mxu0 0.0
    %1272 = vmatprep.subr.mxu0 0.0
    %1273 = vmatpush2.msra.mxu0 0.0
    %1274 = vmatprep.subr.mxu0 0.0
    %1275 = vmatpush2.msra.mxu0 0.0
    %1276 = vmatprep.subr.mxu0 0.0
    %1277 = vmatpush2.msra.mxu0 0.0
    %1278 = vmatprep.subr.mxu0 0.0
    %1279 = vmatpush2.msra.mxu0 0.0
    %1280 = vmatprep.subr.mxu0 0.0
    %1281 = vmatpush2.msra.mxu0 0.0
    %1282 = vmatprep.subr.mxu0 0.0
    %1283 = vmatpush2.msra.mxu0 0.0
    %1284 = vmatprep.subr.mxu0 0.0
    %1285 = vmatpush2.msra.mxu0 0.0
    %1286 = vmatprep.subr.mxu0 0.0
    %1287 = vmatpush2.msra.mxu0 0.0
    %1288 = vmatprep.subr.mxu0 0.0
    %1289 = vmatpush2.msra.mxu0 0.0
    %1290 = vmatprep.subr.mxu0 0.0
    %1291 = vmatpush2.msra.mxu0 0.0
    %1292 = vmatprep.subr.mxu0 0.0
    %1293 = vmatpush2.msra.mxu0 0.0
    %1294 = vmatprep.subr.mxu0 0.0
    %1295 = vmatpush2.msra.mxu0 0.0
    %1296 = vmatprep.subr.mxu0 0.0
    %1297 = vmatpush2.msra.mxu0 0.0
    %1298 = vmatprep.subr.mxu0 0.0
    %1299 = vmatpush2.msra.mxu0 0.0
    %1300 = vmatprep.mubr.f32.mxu0 0.0
    %1301 = vmatmul.mubr.f32.gmra.mxu0 %v1234
    %v1302 = vpop.f32.mrf.mxu0
    %v1303 = vadd.f32 0.0, %v1302
    %v1304 = vpop.f32.mrf.mxu0
    %1305 = vdwg.mxu0
    %v1307 = vrot.slane %v1303, 6
    %v1309 = vadd.f32 %v1128, %v1307
    %v1310 = vxor.u32 %v1309, 2147483648
    %v1311 = vmul.f32 %v1310, 1.442695
    %v1312 = vpow.pop %v1311
    %v1313 = vadd.f32 %v1312, 1.0
    %v1314 = vrcp.pop %v1313
    %v1315 = vmul.f32 1.0, %v1314
    %v1316 = vtanh.pop %v1309
    %v1318 = vrot.slane %v1224, 6
    %v1320 = vmul.f32 %v1315, %v1318
    %1322 = vrot.lane.b32.xlu0 %v1316, 64
    %v1323 = vpop.permute.xlu0 %1322
    %v1325 = vmul.f32 %v1315, %v1323
    %1327 = vrot.lane.b32.xlu0 %v1325, 32
    %v1328 = vpop.permute.xlu0 %1327
    %v1330 = vadd.f32 %v1320, %v1328
    %v1331 = vtanh.pop %v1330
    %1333 = vrot.lane.b32.xlu0 %v1331, 64
    %v1334 = vpop.permute.xlu0 %1333
    %v1336 = vmul.f32 %v1315, %v1334
    %v1338 = vrot.slane %v1336, 2
    %1339 = vrot.lane.b32.xlu0 %v1338, 32
    %v1340 = vpop.permute.xlu0 %1339
    %v1341 = vsel %vm173, %v1340, 0
    %1343 = vmatprep.subr.mxu0 0.0
    %1344 = vmatpush1.msra.mxu0 0.0
    %1345 = vmatprep.subr.mxu0 0.0
    %1346 = vmatpush1.msra.mxu0 0.0
    %1347 = vmatprep.subr.mxu0 0.0
    %1348 = vmatpush1.msra.mxu0 0.0
    %1349 = vmatprep.subr.mxu0 0.0
    %1350 = vmatpush1.msra.mxu0 0.0
    %1351 = vmatprep.subr.mxu0 0.0
    %1352 = vmatpush1.msra.mxu0 0.0
    %1353 = vmatprep.subr.mxu0 0.0
    %1354 = vmatpush1.msra.mxu0 0.0
    %1355 = vmatprep.subr.mxu0 0.0
    %1356 = vmatpush1.msra.mxu0 0.0
    %1357 = vmatprep.subr.mxu0 0.0
    %1358 = vmatpush1.msra.mxu0 0.0
    %1359 = vmatprep.subr.mxu0 0.0
    %1360 = vmatpush1.msra.mxu0 0.0
    %1361 = vmatprep.subr.mxu0 0.0
    %1362 = vmatpush1.msra.mxu0 0.0
    %1363 = vmatprep.subr.mxu0 0.0
    %1364 = vmatpush1.msra.mxu0 0.0
    %1365 = vmatprep.subr.mxu0 0.0
    %1366 = vmatpush1.msra.mxu0 0.0
    %1367 = vmatprep.subr.mxu0 0.0
    %1368 = vmatpush1.msra.mxu0 %v1043
    %1369 = vmatprep.subr.mxu0 0.0
    %1370 = vmatpush1.msra.mxu0 %v1042
    %1371 = vmatprep.subr.mxu0 0.0
    %1372 = vmatpush1.msra.mxu0 %v1041
    %1373 = vmatprep.subr.mxu0 0.0
    %1374 = vmatpush1.msra.mxu0 %v1040
    %1375 = vmatprep.subr.mxu0 0.0
    %1376 = vmatpush2.msra.mxu0 0.0
    %1377 = vmatprep.subr.mxu0 0.0
    %1378 = vmatpush2.msra.mxu0 0.0
    %1379 = vmatprep.subr.mxu0 0.0
    %1380 = vmatpush2.msra.mxu0 0.0
    %1381 = vmatprep.subr.mxu0 0.0
    %1382 = vmatpush2.msra.mxu0 0.0
    %1383 = vmatprep.subr.mxu0 0.0
    %1384 = vmatpush2.msra.mxu0 0.0
    %1385 = vmatprep.subr.mxu0 0.0
    %1386 = vmatpush2.msra.mxu0 0.0
    %1387 = vmatprep.subr.mxu0 0.0
    %1388 = vmatpush2.msra.mxu0 0.0
    %1389 = vmatprep.subr.mxu0 0.0
    %1390 = vmatpush2.msra.mxu0 0.0
    %1391 = vmatprep.subr.mxu0 0.0
    %1392 = vmatpush2.msra.mxu0 0.0
    %1393 = vmatprep.subr.mxu0 0.0
    %1394 = vmatpush2.msra.mxu0 0.0
    %1395 = vmatprep.subr.mxu0 0.0
    %1396 = vmatpush2.msra.mxu0 0.0
    %1397 = vmatprep.subr.mxu0 0.0
    %1398 = vmatpush2.msra.mxu0 0.0
    %1399 = vmatprep.subr.mxu0 0.0
    %1400 = vmatpush2.msra.mxu0 0.0
    %1401 = vmatprep.subr.mxu0 0.0
    %1402 = vmatpush2.msra.mxu0 0.0
    %1403 = vmatprep.subr.mxu0 0.0
    %1404 = vmatpush2.msra.mxu0 0.0
    %1405 = vmatprep.subr.mxu0 0.0
    %1406 = vmatpush2.msra.mxu0 0.0
    %1407 = vmatprep.mubr.f32.mxu0 0.0
    %1408 = vmatmul.mubr.f32.gmra.mxu0 %v1341
    %v1409 = vpop.f32.mrf.mxu0
    %v1410 = vadd.f32 0.0, %v1409
    %v1411 = vpop.f32.mrf.mxu0
    %1412 = vdwg.mxu0
    %v1414 = vrot.slane %v1410, 4
    %v1416 = vadd.f32 %v1128, %v1414
    %v1417 = vxor.u32 %v1416, 2147483648
    %v1418 = vmul.f32 %v1417, 1.442695
    %v1419 = vpow.pop %v1418
    %v1420 = vadd.f32 %v1419, 1.0
    %v1421 = vrcp.pop %v1420
    %v1422 = vmul.f32 1.0, %v1421
    %v1423 = vtanh.pop %v1416
    %v1425 = vrot.slane %v1330, 6
    %v1427 = vmul.f32 %v1422, %v1425
    %1429 = vrot.lane.b32.xlu0 %v1423, 64
    %v1430 = vpop.permute.xlu0 %1429
    %v1432 = vmul.f32 %v1422, %v1430
    %1434 = vrot.lane.b32.xlu0 %v1432, 32
    %v1435 = vpop.permute.xlu0 %1434
    %v1437 = vadd.f32 %v1427, %v1435
    %v1438 = vtanh.pop %v1437
    %1440 = vrot.lane.b32.xlu0 %v1438, 64
    %v1441 = vpop.permute.xlu0 %1440
    %v1443 = vmul.f32 %v1422, %v1441
    %v1445 = vrot.slane %v1443, 4
    %1446 = vrot.lane.b32.xlu0 %v1445, 32
    %v1447 = vpop.permute.xlu0 %1446
    %v1448 = vsel %vm173, %v1447, 0
    %1450 = vmatprep.subr.mxu0 0.0
    %1451 = vmatpush1.msra.mxu0 0.0
    %1452 = vmatprep.subr.mxu0 0.0
    %1453 = vmatpush1.msra.mxu0 0.0
    %1454 = vmatprep.subr.mxu0 0.0
    %1455 = vmatpush1.msra.mxu0 0.0
    %1456 = vmatprep.subr.mxu0 0.0
    %1457 = vmatpush1.msra.mxu0 0.0
    %1458 = vmatprep.subr.mxu0 0.0
    %1459 = vmatpush1.msra.mxu0 0.0
    %1460 = vmatprep.subr.mxu0 0.0
    %1461 = vmatpush1.msra.mxu0 0.0
    %1462 = vmatprep.subr.mxu0 0.0
    %1463 = vmatpush1.msra.mxu0 0.0
    %1464 = vmatprep.subr.mxu0 0.0
    %1465 = vmatpush1.msra.mxu0 0.0
    %1466 = vmatprep.subr.mxu0 0.0
    %1467 = vmatpush1.msra.mxu0 0.0
    %1468 = vmatprep.subr.mxu0 0.0
    %1469 = vmatpush1.msra.mxu0 0.0
    %1470 = vmatprep.subr.mxu0 0.0
    %1471 = vmatpush1.msra.mxu0 0.0
    %1472 = vmatprep.subr.mxu0 0.0
    %1473 = vmatpush1.msra.mxu0 0.0
    %1474 = vmatprep.subr.mxu0 0.0
    %1475 = vmatpush1.msra.mxu0 %v1043
    %1476 = vmatprep.subr.mxu0 0.0
    %1477 = vmatpush1.msra.mxu0 %v1042
    %1478 = vmatprep.subr.mxu0 0.0
    %1479 = vmatpush1.msra.mxu0 %v1041
    %1480 = vmatprep.subr.mxu0 0.0
    %1481 = vmatpush1.msra.mxu0 %v1040
    %1482 = vmatprep.subr.mxu0 0.0
    %1483 = vmatpush2.msra.mxu0 0.0
    %1484 = vmatprep.subr.mxu0 0.0
    %1485 = vmatpush2.msra.mxu0 0.0
    %1486 = vmatprep.subr.mxu0 0.0
    %1487 = vmatpush2.msra.mxu0 0.0
    %1488 = vmatprep.subr.mxu0 0.0
    %1489 = vmatpush2.msra.mxu0 0.0
    %1490 = vmatprep.subr.mxu0 0.0
    %1491 = vmatpush2.msra.mxu0 0.0
    %1492 = vmatprep.subr.mxu0 0.0
    %1493 = vmatpush2.msra.mxu0 0.0
    %1494 = vmatprep.subr.mxu0 0.0
    %1495 = vmatpush2.msra.mxu0 0.0
    %1496 = vmatprep.subr.mxu0 0.0
    %1497 = vmatpush2.msra.mxu0 0.0
    %1498 = vmatprep.subr.mxu0 0.0
    %1499 = vmatpush2.msra.mxu0 0.0
    %1500 = vmatprep.subr.mxu0 0.0
    %1501 = vmatpush2.msra.mxu0 0.0
    %1502 = vmatprep.subr.mxu0 0.0
    %1503 = vmatpush2.msra.mxu0 0.0
    %1504 = vmatprep.subr.mxu0 0.0
    %1505 = vmatpush2.msra.mxu0 0.0
    %1506 = vmatprep.subr.mxu0 0.0
    %1507 = vmatpush2.msra.mxu0 0.0
    %1508 = vmatprep.subr.mxu0 0.0
    %1509 = vmatpush2.msra.mxu0 0.0
    %1510 = vmatprep.subr.mxu0 0.0
    %1511 = vmatpush2.msra.mxu0 0.0
    %1512 = vmatprep.subr.mxu0 0.0
    %1513 = vmatpush2.msra.mxu0 0.0
    %1514 = vmatprep.mubr.f32.mxu0 0.0
    %1515 = vmatmul.mubr.f32.gmra.mxu0 %v1448
    %v1516 = vpop.f32.mrf.mxu0
    %v1517 = vadd.f32 0.0, %v1516
    %v1518 = vpop.f32.mrf.mxu0
    %1519 = vdwg.mxu0
    %v1521 = vrot.slane %v1517, 2
    %v1523 = vadd.f32 %v1128, %v1521
    %v1524 = vxor.u32 %v1523, 2147483648
    %v1525 = vmul.f32 %v1524, 1.442695
    %v1526 = vpow.pop %v1525
    %v1527 = vadd.f32 %v1526, 1.0
    %v1528 = vrcp.pop %v1527
    %v1529 = vmul.f32 1.0, %v1528
    %v1530 = vtanh.pop %v1523
    %v1532 = vrot.slane %v1437, 6
    %v1534 = vmul.f32 %v1529, %v1532
    %1536 = vrot.lane.b32.xlu0 %v1530, 64
    %v1537 = vpop.permute.xlu0 %1536
    %v1539 = vmul.f32 %v1529, %v1537
    %1541 = vrot.lane.b32.xlu0 %v1539, 32
    %v1542 = vpop.permute.xlu0 %1541
    %v1544 = vadd.f32 %v1534, %v1542
    %v1545 = vtanh.pop %v1544
    %1547 = vrot.lane.b32.xlu0 %v1545, 64
    %v1548 = vpop.permute.xlu0 %1547
    %v1550 = vmul.f32 %v1529, %v1548
    %v1552 = vrot.slane %v1550, 6
    %1553 = vrot.lane.b32.xlu0 %v1552, 32
    %v1554 = vpop.permute.xlu0 %1553
    %v1555 = vsel %vm173, %v1554, 0
    %1557 = vmatprep.subr.mxu0 0.0
    %1558 = vmatpush1.msra.mxu0 0.0
    %1559 = vmatprep.subr.mxu0 0.0
    %1560 = vmatpush1.msra.mxu0 0.0
    %1561 = vmatprep.subr.mxu0 0.0
    %1562 = vmatpush1.msra.mxu0 0.0
    %1563 = vmatprep.subr.mxu0 0.0
    %1564 = vmatpush1.msra.mxu0 0.0
    %1565 = vmatprep.subr.mxu0 0.0
    %1566 = vmatpush1.msra.mxu0 0.0
    %1567 = vmatprep.subr.mxu0 0.0
    %1568 = vmatpush1.msra.mxu0 0.0
    %1569 = vmatprep.subr.mxu0 0.0
    %1570 = vmatpush1.msra.mxu0 0.0
    %1571 = vmatprep.subr.mxu0 0.0
    %1572 = vmatpush1.msra.mxu0 0.0
    %1573 = vmatprep.subr.mxu0 0.0
    %1574 = vmatpush1.msra.mxu0 0.0
    %1575 = vmatprep.subr.mxu0 0.0
    %1576 = vmatpush1.msra.mxu0 0.0
    %1577 = vmatprep.subr.mxu0 0.0
    %1578 = vmatpush1.msra.mxu0 0.0
    %1579 = vmatprep.subr.mxu0 0.0
    %1580 = vmatpush1.msra.mxu0 0.0
    %1581 = vmatprep.subr.mxu0 0.0
    %1582 = vmatpush1.msra.mxu0 %v1043
    %1583 = vmatprep.subr.mxu0 0.0
    %1584 = vmatpush1.msra.mxu0 %v1042
    %1585 = vmatprep.subr.mxu0 0.0
    %1586 = vmatpush1.msra.mxu0 %v1041
    %1587 = vmatprep.subr.mxu0 0.0
    %1588 = vmatpush1.msra.mxu0 %v1040
    %1589 = vmatprep.subr.mxu0 0.0
    %1590 = vmatpush2.msra.mxu0 0.0
    %1591 = vmatprep.subr.mxu0 0.0
    %1592 = vmatpush2.msra.mxu0 0.0
    %1593 = vmatprep.subr.mxu0 0.0
    %1594 = vmatpush2.msra.mxu0 0.0
    %1595 = vmatprep.subr.mxu0 0.0
    %1596 = vmatpush2.msra.mxu0 0.0
    %1597 = vmatprep.subr.mxu0 0.0
    %1598 = vmatpush2.msra.mxu0 0.0
    %1599 = vmatprep.subr.mxu0 0.0
    %1600 = vmatpush2.msra.mxu0 0.0
    %1601 = vmatprep.subr.mxu0 0.0
    %1602 = vmatpush2.msra.mxu0 0.0
    %1603 = vmatprep.subr.mxu0 0.0
    %1604 = vmatpush2.msra.mxu0 0.0
    %1605 = vmatprep.subr.mxu0 0.0
    %1606 = vmatpush2.msra.mxu0 0.0
    %1607 = vmatprep.subr.mxu0 0.0
    %1608 = vmatpush2.msra.mxu0 0.0
    %1609 = vmatprep.subr.mxu0 0.0
    %1610 = vmatpush2.msra.mxu0 0.0
    %1611 = vmatprep.subr.mxu0 0.0
    %1612 = vmatpush2.msra.mxu0 0.0
    %1613 = vmatprep.subr.mxu0 0.0
    %1614 = vmatpush2.msra.mxu0 0.0
    %1615 = vmatprep.subr.mxu0 0.0
    %1616 = vmatpush2.msra.mxu0 0.0
    %1617 = vmatprep.subr.mxu0 0.0
    %1618 = vmatpush2.msra.mxu0 0.0
    %1619 = vmatprep.subr.mxu0 0.0
    %1620 = vmatpush2.msra.mxu0 0.0
    %1621 = vmatprep.mubr.f32.mxu0 0.0
    %1622 = vmatmul.mubr.f32.gmra.mxu0 %v1555
    %v1623 = vpop.f32.mrf.mxu0
    %v1624 = vadd.f32 0.0, %v1623
    %v1625 = vpop.f32.mrf.mxu0
    %1626 = vdwg.mxu0
    %v1627 = vadd.f32 %v1133, %v1624
    %v1628 = vxor.u32 %v1627, 2147483648
    %v1629 = vmul.f32 %v1628, 1.442695
    %v1630 = vpow.pop %v1629
    %v1631 = vadd.f32 %v1630, 1.0
    %v1632 = vrcp.pop %v1631
    %v1633 = vmul.f32 1.0, %v1632
    %v1634 = vtanh.pop %v1627
    %v1636 = vrot.slane %v1544, 6
    %v1638 = vmul.f32 %v1633, %v1636
    %1640 = vrot.lane.b32.xlu0 %v1634, 64
    %v1641 = vpop.permute.xlu0 %1640
    %v1643 = vmul.f32 %v1633, %v1641
    %1645 = vrot.lane.b32.xlu0 %v1643, 32
    %v1646 = vpop.permute.xlu0 %1645
    %v1648 = vadd.f32 %v1638, %v1646
    %v1649 = vtanh.pop %v1648
    %1651 = vrot.lane.b32.xlu0 %v1649, 64
    %v1652 = vpop.permute.xlu0 %1651
    %v1654 = vmul.f32 %v1633, %v1652
    %1656 = vrot.lane.b32.xlu0 %v1654, 32
    %v1657 = vpop.permute.xlu0 %1656
    %v1658 = vsel %vm173, %v1657, 0
    %1660 = vmatprep.subr.mxu0 0.0
    %1661 = vmatpush1.msra.mxu0 0.0
    %1662 = vmatprep.subr.mxu0 0.0
    %1663 = vmatpush1.msra.mxu0 0.0
    %1664 = vmatprep.subr.mxu0 0.0
    %1665 = vmatpush1.msra.mxu0 0.0
    %1666 = vmatprep.subr.mxu0 0.0
    %1667 = vmatpush1.msra.mxu0 0.0
    %1668 = vmatprep.subr.mxu0 0.0
    %1669 = vmatpush1.msra.mxu0 0.0
    %1670 = vmatprep.subr.mxu0 0.0
    %1671 = vmatpush1.msra.mxu0 0.0
    %1672 = vmatprep.subr.mxu0 0.0
    %1673 = vmatpush1.msra.mxu0 0.0
    %1674 = vmatprep.subr.mxu0 0.0
    %1675 = vmatpush1.msra.mxu0 0.0
    %1676 = vmatprep.subr.mxu0 0.0
    %1677 = vmatpush1.msra.mxu0 0.0
    %1678 = vmatprep.subr.mxu0 0.0
    %1679 = vmatpush1.msra.mxu0 0.0
    %1680 = vmatprep.subr.mxu0 0.0
    %1681 = vmatpush1.msra.mxu0 0.0
    %1682 = vmatprep.subr.mxu0 0.0
    %1683 = vmatpush1.msra.mxu0 0.0
    %1684 = vmatprep.subr.mxu0 0.0
    %1685 = vmatpush1.msra.mxu0 %v1043
    %1686 = vmatprep.subr.mxu0 0.0
    %1687 = vmatpush1.msra.mxu0 %v1042
    %1688 = vmatprep.subr.mxu0 0.0
    %1689 = vmatpush1.msra.mxu0 %v1041
    %1690 = vmatprep.subr.mxu0 0.0
    %1691 = vmatpush1.msra.mxu0 %v1040
    %1692 = vmatprep.subr.mxu0 0.0
    %1693 = vmatpush2.msra.mxu0 0.0
    %1694 = vmatprep.subr.mxu0 0.0
    %1695 = vmatpush2.msra.mxu0 0.0
    %1696 = vmatprep.subr.mxu0 0.0
    %1697 = vmatpush2.msra.mxu0 0.0
    %1698 = vmatprep.subr.mxu0 0.0
    %1699 = vmatpush2.msra.mxu0 0.0
    %1700 = vmatprep.subr.mxu0 0.0
    %1701 = vmatpush2.msra.mxu0 0.0
    %1702 = vmatprep.subr.mxu0 0.0
    %1703 = vmatpush2.msra.mxu0 0.0
    %1704 = vmatprep.subr.mxu0 0.0
    %1705 = vmatpush2.msra.mxu0 0.0
    %1706 = vmatprep.subr.mxu0 0.0
    %1707 = vmatpush2.msra.mxu0 0.0
    %1708 = vmatprep.subr.mxu0 0.0
    %1709 = vmatpush2.msra.mxu0 0.0
    %1710 = vmatprep.subr.mxu0 0.0
    %1711 = vmatpush2.msra.mxu0 0.0
    %1712 = vmatprep.subr.mxu0 0.0
    %1713 = vmatpush2.msra.mxu0 0.0
    %1714 = vmatprep.subr.mxu0 0.0
    %1715 = vmatpush2.msra.mxu0 0.0
    %1716 = vmatprep.subr.mxu0 0.0
    %1717 = vmatpush2.msra.mxu0 0.0
    %1718 = vmatprep.subr.mxu0 0.0
    %1719 = vmatpush2.msra.mxu0 0.0
    %1720 = vmatprep.subr.mxu0 0.0
    %1721 = vmatpush2.msra.mxu0 0.0
    %1722 = vmatprep.subr.mxu0 0.0
    %1723 = vmatpush2.msra.mxu0 0.0
    %1724 = vmatprep.mubr.f32.mxu0 0.0
    %1725 = vmatmul.mubr.f32.gmra.mxu0 %v1658
    %v1726 = vpop.f32.mrf.mxu0
    %v1727 = vadd.f32 0.0, %v1726
    %v1728 = vpop.f32.mrf.mxu0
    %1729 = vdwg.mxu0
    %v1731 = vrot.slane %v1727, 6
    %v1733 = vadd.f32 %v1133, %v1731
    %v1734 = vxor.u32 %v1733, 2147483648
    %v1735 = vmul.f32 %v1734, 1.442695
    %v1736 = vpow.pop %v1735
    %v1737 = vadd.f32 %v1736, 1.0
    %v1738 = vrcp.pop %v1737
    %v1739 = vmul.f32 1.0, %v1738
    %v1740 = vtanh.pop %v1733
    %v1742 = vrot.slane %v1648, 6
    %v1744 = vmul.f32 %v1739, %v1742
    %1746 = vrot.lane.b32.xlu0 %v1740, 64
    %v1747 = vpop.permute.xlu0 %1746
    %v1749 = vmul.f32 %v1739, %v1747
    %1751 = vrot.lane.b32.xlu0 %v1749, 32
    %v1752 = vpop.permute.xlu0 %1751
    %v1754 = vadd.f32 %v1744, %v1752
    %v1755 = vtanh.pop %v1754
    %1757 = vrot.lane.b32.xlu0 %v1755, 64
    %v1758 = vpop.permute.xlu0 %1757
    %v1760 = vmul.f32 %v1739, %v1758
    %v1762 = vrot.slane %v1760, 2
    %1763 = vrot.lane.b32.xlu0 %v1762, 32
    %v1764 = vpop.permute.xlu0 %1763
    %v1765 = vsel %vm173, %v1764, 0
    %1767 = vmatprep.subr.mxu0 0.0
    %1768 = vmatpush1.msra.mxu0 0.0
    %1769 = vmatprep.subr.mxu0 0.0
    %1770 = vmatpush1.msra.mxu0 0.0
    %1771 = vmatprep.subr.mxu0 0.0
    %1772 = vmatpush1.msra.mxu0 0.0
    %1773 = vmatprep.subr.mxu0 0.0
    %1774 = vmatpush1.msra.mxu0 0.0
    %1775 = vmatprep.subr.mxu0 0.0
    %1776 = vmatpush1.msra.mxu0 0.0
    %1777 = vmatprep.subr.mxu0 0.0
    %1778 = vmatpush1.msra.mxu0 0.0
    %1779 = vmatprep.subr.mxu0 0.0
    %1780 = vmatpush1.msra.mxu0 0.0
    %1781 = vmatprep.subr.mxu0 0.0
    %1782 = vmatpush1.msra.mxu0 0.0
    %1783 = vmatprep.subr.mxu0 0.0
    %1784 = vmatpush1.msra.mxu0 0.0
    %1785 = vmatprep.subr.mxu0 0.0
    %1786 = vmatpush1.msra.mxu0 0.0
    %1787 = vmatprep.subr.mxu0 0.0
    %1788 = vmatpush1.msra.mxu0 0.0
    %1789 = vmatprep.subr.mxu0 0.0
    %1790 = vmatpush1.msra.mxu0 0.0
    %1791 = vmatprep.subr.mxu0 0.0
    %1792 = vmatpush1.msra.mxu0 %v1043
    %1793 = vmatprep.subr.mxu0 0.0
    %1794 = vmatpush1.msra.mxu0 %v1042
    %1795 = vmatprep.subr.mxu0 0.0
    %1796 = vmatpush1.msra.mxu0 %v1041
    %1797 = vmatprep.subr.mxu0 0.0
    %1798 = vmatpush1.msra.mxu0 %v1040
    %1799 = vmatprep.subr.mxu0 0.0
    %1800 = vmatpush2.msra.mxu0 0.0
    %1801 = vmatprep.subr.mxu0 0.0
    %1802 = vmatpush2.msra.mxu0 0.0
    %1803 = vmatprep.subr.mxu0 0.0
    %1804 = vmatpush2.msra.mxu0 0.0
    %1805 = vmatprep.subr.mxu0 0.0
    %1806 = vmatpush2.msra.mxu0 0.0
    %1807 = vmatprep.subr.mxu0 0.0
    %1808 = vmatpush2.msra.mxu0 0.0
    %1809 = vmatprep.subr.mxu0 0.0
    %1810 = vmatpush2.msra.mxu0 0.0
    %1811 = vmatprep.subr.mxu0 0.0
    %1812 = vmatpush2.msra.mxu0 0.0
    %1813 = vmatprep.subr.mxu0 0.0
    %1814 = vmatpush2.msra.mxu0 0.0
    %1815 = vmatprep.subr.mxu0 0.0
    %1816 = vmatpush2.msra.mxu0 0.0
    %1817 = vmatprep.subr.mxu0 0.0
    %1818 = vmatpush2.msra.mxu0 0.0
    %1819 = vmatprep.subr.mxu0 0.0
    %1820 = vmatpush2.msra.mxu0 0.0
    %1821 = vmatprep.subr.mxu0 0.0
    %1822 = vmatpush2.msra.mxu0 0.0
    %1823 = vmatprep.subr.mxu0 0.0
    %1824 = vmatpush2.msra.mxu0 0.0
    %1825 = vmatprep.subr.mxu0 0.0
    %1826 = vmatpush2.msra.mxu0 0.0
    %1827 = vmatprep.subr.mxu0 0.0
    %1828 = vmatpush2.msra.mxu0 0.0
    %1829 = vmatprep.subr.mxu0 0.0
    %1830 = vmatpush2.msra.mxu0 0.0
    %1831 = vmatprep.mubr.f32.mxu0 0.0
    %1832 = vmatmul.mubr.f32.gmra.mxu0 %v1765
    %v1833 = vpop.f32.mrf.mxu0
    %v1834 = vadd.f32 0.0, %v1833
    %v1835 = vpop.f32.mrf.mxu0
    %1836 = vdwg.mxu0
    %v1838 = vrot.slane %v1834, 4
    %v1840 = vadd.f32 %v1133, %v1838
    %v1841 = vxor.u32 %v1840, 2147483648
    %v1842 = vmul.f32 %v1841, 1.442695
    %v1843 = vpow.pop %v1842
    %v1844 = vadd.f32 %v1843, 1.0
    %v1845 = vrcp.pop %v1844
    %v1846 = vmul.f32 1.0, %v1845
    %v1847 = vtanh.pop %v1840
    %v1849 = vrot.slane %v1754, 6
    %v1851 = vmul.f32 %v1846, %v1849
    %1853 = vrot.lane.b32.xlu0 %v1847, 64
    %v1854 = vpop.permute.xlu0 %1853
    %v1856 = vmul.f32 %v1846, %v1854
    %1858 = vrot.lane.b32.xlu0 %v1856, 32
    %v1859 = vpop.permute.xlu0 %1858
    %v1861 = vadd.f32 %v1851, %v1859
    %v1862 = vtanh.pop %v1861
    %1864 = vrot.lane.b32.xlu0 %v1862, 64
    %v1865 = vpop.permute.xlu0 %1864
    %v1867 = vmul.f32 %v1846, %v1865
    %v1869 = vrot.slane %v1867, 4
    %1870 = vrot.lane.b32.xlu0 %v1869, 32
    %v1871 = vpop.permute.xlu0 %1870
    %v1872 = vsel %vm173, %v1871, 0
    %1874 = vmatprep.subr.mxu0 0.0
    %1875 = vmatpush1.msra.mxu0 0.0
    %1876 = vmatprep.subr.mxu0 0.0
    %1877 = vmatpush1.msra.mxu0 0.0
    %1878 = vmatprep.subr.mxu0 0.0
    %1879 = vmatpush1.msra.mxu0 0.0
    %1880 = vmatprep.subr.mxu0 0.0
    %1881 = vmatpush1.msra.mxu0 0.0
    %1882 = vmatprep.subr.mxu0 0.0
    %1883 = vmatpush1.msra.mxu0 0.0
    %1884 = vmatprep.subr.mxu0 0.0
    %1885 = vmatpush1.msra.mxu0 0.0
    %1886 = vmatprep.subr.mxu0 0.0
    %1887 = vmatpush1.msra.mxu0 0.0
    %1888 = vmatprep.subr.mxu0 0.0
    %1889 = vmatpush1.msra.mxu0 0.0
    %1890 = vmatprep.subr.mxu0 0.0
    %1891 = vmatpush1.msra.mxu0 0.0
    %1892 = vmatprep.subr.mxu0 0.0
    %1893 = vmatpush1.msra.mxu0 0.0
    %1894 = vmatprep.subr.mxu0 0.0
    %1895 = vmatpush1.msra.mxu0 0.0
    %1896 = vmatprep.subr.mxu0 0.0
    %1897 = vmatpush1.msra.mxu0 0.0
    %1898 = vmatprep.subr.mxu0 0.0
    %1899 = vmatpush1.msra.mxu0 %v1043
    %1900 = vmatprep.subr.mxu0 0.0
    %1901 = vmatpush1.msra.mxu0 %v1042
    %1902 = vmatprep.subr.mxu0 0.0
    %1903 = vmatpush1.msra.mxu0 %v1041
    %1904 = vmatprep.subr.mxu0 0.0
    %1905 = vmatpush1.msra.mxu0 %v1040
    %1906 = vmatprep.subr.mxu0 0.0
    %1907 = vmatpush2.msra.mxu0 0.0
    %1908 = vmatprep.subr.mxu0 0.0
    %1909 = vmatpush2.msra.mxu0 0.0
    %1910 = vmatprep.subr.mxu0 0.0
    %1911 = vmatpush2.msra.mxu0 0.0
    %1912 = vmatprep.subr.mxu0 0.0
    %1913 = vmatpush2.msra.mxu0 0.0
    %1914 = vmatprep.subr.mxu0 0.0
    %1915 = vmatpush2.msra.mxu0 0.0
    %1916 = vmatprep.subr.mxu0 0.0
    %1917 = vmatpush2.msra.mxu0 0.0
    %1918 = vmatprep.subr.mxu0 0.0
    %1919 = vmatpush2.msra.mxu0 0.0
    %1920 = vmatprep.subr.mxu0 0.0
    %1921 = vmatpush2.msra.mxu0 0.0
    %1922 = vmatprep.subr.mxu0 0.0
    %1923 = vmatpush2.msra.mxu0 0.0
    %1924 = vmatprep.subr.mxu0 0.0
    %1925 = vmatpush2.msra.mxu0 0.0
    %1926 = vmatprep.subr.mxu0 0.0
    %1927 = vmatpush2.msra.mxu0 0.0
    %1928 = vmatprep.subr.mxu0 0.0
    %1929 = vmatpush2.msra.mxu0 0.0
    %1930 = vmatprep.subr.mxu0 0.0
    %1931 = vmatpush2.msra.mxu0 0.0
    %1932 = vmatprep.subr.mxu0 0.0
    %1933 = vmatpush2.msra.mxu0 0.0
    %1934 = vmatprep.subr.mxu0 0.0
    %1935 = vmatpush2.msra.mxu0 0.0
    %1936 = vmatprep.subr.mxu0 0.0
    %1937 = vmatpush2.msra.mxu0 0.0
    %1938 = vmatprep.mubr.f32.mxu0 0.0
    %1939 = vmatmul.mubr.f32.gmra.mxu0 %v1872
    %v1940 = vpop.f32.mrf.mxu0
    %v1941 = vadd.f32 0.0, %v1940
    %v1942 = vpop.f32.mrf.mxu0
    %1943 = vdwg.mxu0
    %v1945 = vrot.slane %v1941, 2
    %v1947 = vadd.f32 %v1133, %v1945
    %v1948 = vxor.u32 %v1947, 2147483648
    %v1949 = vmul.f32 %v1948, 1.442695
    %v1950 = vpow.pop %v1949
    %v1951 = vadd.f32 %v1950, 1.0
    %v1952 = vrcp.pop %v1951
    %v1953 = vmul.f32 1.0, %v1952
    %v1954 = vtanh.pop %v1947
    %v1956 = vrot.slane %v1861, 6
    %v1958 = vmul.f32 %v1953, %v1956
    %1960 = vrot.lane.b32.xlu0 %v1954, 64
    %v1961 = vpop.permute.xlu0 %1960
    %v1963 = vmul.f32 %v1953, %v1961
    %1965 = vrot.lane.b32.xlu0 %v1963, 32
    %v1966 = vpop.permute.xlu0 %1965
    %v1968 = vadd.f32 %v1958, %v1966
    %v1969 = vtanh.pop %v1968
    %1971 = vrot.lane.b32.xlu0 %v1969, 64
    %v1972 = vpop.permute.xlu0 %1971
    %v1974 = vmul.f32 %v1953, %v1972
    %1976 = vrot.lane.b32.xlu0 %v1974, 32
    %v1977 = vpop.permute.xlu0 %1976
    %s1979 = scalar_lea.vmem [#allocation9], 2
    %1980 = vst.msk [vmem:[%s1979 - $0x6] sm:$0xc0] %vm1029, %v1977
    %1982 = vrot.lane.b32.xlu0 %v1968, 96
    %v1983 = vpop.permute.xlu0 %1982
    %s1985 = scalar_lea.vmem [#allocation11], 2
    %1986 = vst.msk [vmem:[%s1985 - $0x6] sm:$0xc0] %vm1029, %v1983
    %v1987 = vmax.f32 %v1974, 0.0
    %v1988 = vld [vmem:[%s7] sm:$0xff]
    %v1989 = vld [vmem:[%s7 + $0x8] sm:$0xff]
    %v1990 = vld [vmem:[%s7 + $0x10] sm:$0xff]
    %v1991 = vld [vmem:[%s7 + $0x18] sm:$0xff]
    %v1992 = vld [vmem:[#allocation7] sm:$0x1]
    %v1994 = vlaneseq
    %v1995 = vshrl.u32 %v1994, 7
    %v1996 = vsub.s32 0, %v1995
    %v1997 = vrot.slane %v1992, %v1996
    %v2000 = vrot.slane %v1987, 6
    %2001 = vrot.lane.b32.xlu0 %v2000, 32
    %v2002 = vpop.permute.xlu0 %2001
    %v2003 = vsel %vm173, %v2002, 0
    %2005 = vmatprep.subr.mxu0 0.0
    %2006 = vmatpush1.msra.mxu0 0.0
    %2007 = vmatprep.subr.mxu0 0.0
    %2008 = vmatpush1.msra.mxu0 0.0
    %2009 = vmatprep.subr.mxu0 0.0
    %2010 = vmatpush1.msra.mxu0 0.0
    %2011 = vmatprep.subr.mxu0 0.0
    %2012 = vmatpush1.msra.mxu0 0.0
    %2013 = vmatprep.subr.mxu0 0.0
    %2014 = vmatpush1.msra.mxu0 0.0
    %2015 = vmatprep.subr.mxu0 0.0
    %2016 = vmatpush1.msra.mxu0 0.0
    %2017 = vmatprep.subr.mxu0 0.0
    %2018 = vmatpush1.msra.mxu0 0.0
    %2019 = vmatprep.subr.mxu0 0.0
    %2020 = vmatpush1.msra.mxu0 0.0
    %2021 = vmatprep.subr.mxu0 0.0
    %2022 = vmatpush1.msra.mxu0 0.0
    %2023 = vmatprep.subr.mxu0 0.0
    %2024 = vmatpush1.msra.mxu0 0.0
    %2025 = vmatprep.subr.mxu0 0.0
    %2026 = vmatpush1.msra.mxu0 0.0
    %2027 = vmatprep.subr.mxu0 0.0
    %2028 = vmatpush1.msra.mxu0 0.0
    %2029 = vmatprep.subr.mxu0 0.0
    %2030 = vmatpush1.msra.mxu0 %v1991
    %2031 = vmatprep.subr.mxu0 0.0
    %2032 = vmatpush1.msra.mxu0 %v1990
    %2033 = vmatprep.subr.mxu0 0.0
    %2034 = vmatpush1.msra.mxu0 %v1989
    %2035 = vmatprep.subr.mxu0 0.0
    %2036 = vmatpush1.msra.mxu0 %v1988
    %2037 = vmatprep.subr.mxu0 0.0
    %2038 = vmatpush2.msra.mxu0 0.0
    %2039 = vmatprep.subr.mxu0 0.0
    %2040 = vmatpush2.msra.mxu0 0.0
    %2041 = vmatprep.subr.mxu0 0.0
    %2042 = vmatpush2.msra.mxu0 0.0
    %2043 = vmatprep.subr.mxu0 0.0
    %2044 = vmatpush2.msra.mxu0 0.0
    %2045 = vmatprep.subr.mxu0 0.0
    %2046 = vmatpush2.msra.mxu0 0.0
    %2047 = vmatprep.subr.mxu0 0.0
    %2048 = vmatpush2.msra.mxu0 0.0
    %2049 = vmatprep.subr.mxu0 0.0
    %2050 = vmatpush2.msra.mxu0 0.0
    %2051 = vmatprep.subr.mxu0 0.0
    %2052 = vmatpush2.msra.mxu0 0.0
    %2053 = vmatprep.subr.mxu0 0.0
    %2054 = vmatpush2.msra.mxu0 0.0
    %2055 = vmatprep.subr.mxu0 0.0
    %2056 = vmatpush2.msra.mxu0 0.0
    %2057 = vmatprep.subr.mxu0 0.0
    %2058 = vmatpush2.msra.mxu0 0.0
    %2059 = vmatprep.subr.mxu0 0.0
    %2060 = vmatpush2.msra.mxu0 0.0
    %2061 = vmatprep.subr.mxu0 0.0
    %2062 = vmatpush2.msra.mxu0 0.0
    %2063 = vmatprep.subr.mxu0 0.0
    %2064 = vmatpush2.msra.mxu0 0.0
    %2065 = vmatprep.subr.mxu0 0.0
    %2066 = vmatpush2.msra.mxu0 0.0
    %2067 = vmatprep.subr.mxu0 0.0
    %2068 = vmatpush2.msra.mxu0 0.0
    %2069 = vmatprep.mubr.f32.mxu0 0.0
    %2070 = vmatmul.mubr.f32.gmra.mxu0 %v2003
    %v2071 = vpop.f32.mrf.mxu0
    %v2072 = vadd.f32 %v1997, %v2071
    %v2073 = vpop.f32.mrf.mxu0
    %2074 = vdwg.mxu0
    %vm2075 = vcmask 17408
    %2076 = vst.msk [vmem:[#allocation8] sm:$0x3] %vm2075, %v2072
    // Predicated region
    $region50: #{rnn_forward.1} parent=1 // pred_check
      _
    $region51: #{rnn_forward.1} parent=1 // pred_check_branch
      %2078 = sbr.rel (0) target = $region53
    $region52: #{rnn_forward.1} parent=1 // pred_region
      %s2080 = ssub.s32 32, 32
      %2081 = vsyncadd [#allocation4], %s2080
      %s2083 = sshll.u32 [#allocation8], 4
      %s2084 = int_to_ptr.vmem [resolvable:$true] %s2083
      %2086 = dma.vmem_to_hbm [thread:$0]  %s2084, 32, %s9, [#allocation4]
    $region53: #{rnn_forward.1} parent=1 // pred_fallthru
      _
    // Predicated region
    $region54: #{rnn_forward.1} parent=1 // pred_check
      _
    $region55: #{rnn_forward.1} parent=1 // pred_check_branch
      %2088 = sbr.rel (0) target = $region57
    $region56: #{rnn_forward.1} parent=1 // pred_region
      %s2090 = ssub.s32 64, 64
      %2091 = vsyncadd [#allocation10], %s2090
      %s2092 = sshll.u32 [#allocation9], 4
      %s2093 = int_to_ptr.vmem [resolvable:$true] %s2092
      %2098 = dma.vmem_to_hbm [thread:$0]  %s2093, 64, %s10, [#allocation10], 32, 32, 2
    $region57: #{rnn_forward.1} parent=1 // pred_fallthru
      _
    // Predicated region
    $region58: #{rnn_forward.1} parent=1 // pred_check
      _
    $region59: #{rnn_forward.1} parent=1 // pred_check_branch
      %2100 = sbr.rel (0) target = $region61
    $region60: #{rnn_forward.1} parent=1 // pred_region
      %s2102 = ssub.s32 64, 64
      %2103 = vsyncadd [#allocation10], %s2102
      %s2104 = sshll.u32 [#allocation11], 4
      %s2105 = int_to_ptr.vmem [resolvable:$true] %s2104
      %2110 = dma.vmem_to_hbm [thread:$0]  %s2105, 64, %s11, [#allocation10], 32, 32, 2
    $region61: #{rnn_forward.1} parent=1 // pred_fallthru
      _
    // Predicated region
    $region62: #{rnn_forward.1} parent=1 // pred_check
      _
    $region63: #{rnn_forward.1} parent=1 // pred_check_branch
      %2112 = sbr.rel (0) target = $region65
    $region64: #{rnn_forward.1} parent=1 // pred_region
      %2113 = dma.done [#allocation4], 32
    $region65: #{rnn_forward.1} parent=1 // pred_fallthru
      _
    // Predicated region
    $region66: #{rnn_forward.1} parent=1 // pred_check
      _
    $region67: #{rnn_forward.1} parent=1 // pred_check_branch
      %2115 = sbr.rel (0) target = $region69
    $region68: #{rnn_forward.1} parent=1 // pred_region
      %2116 = dma.done [#allocation10], 64
    $region69: #{rnn_forward.1} parent=1 // pred_fallthru
      _
    // Predicated region
    $region70: #{rnn_forward.1} parent=1 // pred_check
      _
    $region71: #{rnn_forward.1} parent=1 // pred_check_branch
      %2118 = sbr.rel (0) target = $region73
    $region72: #{rnn_forward.1} parent=1 // pred_region
      %2119 = dma.done [#allocation10], 64
    $region73: #{rnn_forward.1} parent=1 // pred_fallthru
      _
    %2120 = vsyncpa [#allocation3], 1
    %2121 = vsyncpa [#allocation6], 1
    %2122 = vsyncpa [#allocation4], 1
    %2123 = vsyncpa [#allocation10], 1

</llo_original>
